<compile_context>
chip_gen: v5e
topology: v5e:2x2
jax: 0.10.0
libtpu: 0.0.40
codegen_flags: <defaults>
</compile_context>

<pallas_src>
import jax
import jax.numpy as jnp
from jax.experimental import pallas as pl
from jax.experimental.pallas import tpu as pltpu

EPS = 1e-5


def _conv_bn_add_relu_kernel(x_ref, w_ref, r_ref, g_ref, b_ref, o_ref):
    # x_ref: (Cin, M)    stride-2 subsampled input, channel-major (NCHW-native)
    # w_ref: (Cout, Cin) 1x1 conv weight
    # r_ref: (Cout, M)   residual (x119), channel-major
    # g_ref: (Cout, 1)   BN gamma
    # b_ref: (Cout, 1)   BN beta
    # o_ref: (Cout, M)   output, channel-major (reshapes directly to NCHW)
    w = w_ref[...]
    x = x_ref[...]
    # Conv as channel contraction on the MXU: (Cout, Cin) @ (Cin, M).
    y = jnp.dot(w, x, preferred_element_type=jnp.float32)          # (Cout, M)

    inv_m = 1.0 / y.shape[1]
    # Training-mode BN batch stats: per-channel (per-row) reductions over M.
    mean = jnp.sum(y, axis=1, keepdims=True) * inv_m                # (Cout, 1)
    d = y - mean
    var = jnp.sum(d * d, axis=1, keepdims=True) * inv_m             # biased var

    scale = jax.lax.rsqrt(var + EPS) * g_ref[...]                   # gamma folded

    # normalize + affine + residual + ReLU in one fused (Cout, M) pass.
    o_ref[...] = jnp.maximum(d * scale + b_ref[...] + r_ref[...], 0.0)


@jax.jit
def conv_bn_add_relu(x109, x119, weight, gamma, beta):
    """x109: (1,160,14,14) NCHW, x119: (1,400,7,7) NCHW, weight: (400,160,1,1)."""
    n, cin, h, w_sp = x109.shape
    cout = weight.shape[0]
    if n != 1:
        # TODO(synk): N>1 needs a (N,C,H,W)->(C, N*H*W) transpose; module uses N=1.
        raise NotImplementedError("kernel assumes batch size 1 (channel-major bitcasts)")
    ho, wo = (h + 1) // 2, (w_sp + 1) // 2
    m = ho * wo

    # Stride-2 1x1 conv == spatial subsample + channel contraction.  The slice
    # below is the only data-moving wrapper op; every reshape is a bitcast
    # because NCHW with N=1 is already channel-major.
    x_cm = x109[:, :, ::2, ::2].reshape(cin, m).astype(jnp.float32)   # (160, 49)
    r_cm = x119.reshape(cout, m).astype(jnp.float32)                  # (400, 49)
    w_cm = weight.reshape(cout, cin).astype(jnp.float32)              # (400, 160)
    g_cm = gamma.reshape(cout, 1).astype(jnp.float32)                 # (400, 1)
    b_cm = beta.reshape(cout, 1).astype(jnp.float32)                  # (400, 1)

    cost = pl.CostEstimate(
        flops=2 * cout * cin * m + 8 * cout * m,
        transcendentals=cout,
        bytes_accessed=4 * (cin * m + cout * cin + 2 * cout * m + 2 * cout),
    )

    vmem = pl.BlockSpec(memory_space=pltpu.MemorySpace.VMEM)
    out = pl.pallas_call(
        _conv_bn_add_relu_kernel,
        out_shape=jax.ShapeDtypeStruct((cout, m), jnp.float32),
        in_specs=[vmem, vmem, vmem, vmem, vmem],
        out_specs=vmem,
        cost_estimate=cost,
    )(x_cm, w_cm, r_cm, g_cm, b_cm)

    # (Cout, M) row-major is exactly (1, Cout, Ho, Wo) NCHW: free reshape.
    return out.reshape(n, cout, ho, wo)


def _reference(x109, x119, weight, gamma, beta):
    # Pure-JAX reference with identical semantics (training-mode BN).
    xs = x109[:, :, ::2, ::2]
    y = jnp.einsum('nchw,oc->nohw', xs, weight.reshape(weight.shape[0], -1))
    mean = jnp.mean(y, axis=(0, 2, 3), keepdims=True)
    var = jnp.mean((y - mean) ** 2, axis=(0, 2, 3), keepdims=True)
    y = (y - mean) / jnp.sqrt(var + EPS)
    y = y * gamma.reshape(1, -1, 1, 1) + beta.reshape(1, -1, 1, 1)
    return jnp.maximum(y + x119, 0.0)


if __name__ == "__main__":
    key = jax.random.PRNGKey(0)
    k1, k2, k3 = jax.random.split(key, 3)

    # shapes implied by the module's forward
    x109 = jax.random.normal(k1, (1, 160, 14, 14), dtype=jnp.float32)
    x119 = jax.random.normal(k2, (1, 400, 7, 7), dtype=jnp.float32)

    # deterministic parameter init (Conv2d weight; BN gamma=1, beta=0 as in torch)
    weight = 0.05 * jax.random.normal(k3, (400, 160, 1, 1), dtype=jnp.float32)
    gamma = jnp.ones((400,), dtype=jnp.float32)
    beta = jnp.zeros((400,), dtype=jnp.float32)

    out = conv_bn_add_relu(x109, x119, weight, gamma, beta)
    out = jax.block_until_ready(out)

    ref = _reference(x109, x119, weight, gamma, beta)
    assert out.shape == (1, 400, 7, 7), out.shape
    assert jnp.allclose(out, ref, atol=1e-4, rtol=1e-4), "mismatch vs reference"

    print("KERNEL_OK")
</pallas_src>

<mosaic_0001>
module attributes {stable_mosaic.version = 11 : i64} {
  func.func @_conv_bn_add_relu_kernel(%arg0: memref<160x49xf32, #tpu.memory_space<vmem>>, %arg1: memref<400x160xf32, #tpu.memory_space<vmem>>, %arg2: memref<400x49xf32, #tpu.memory_space<vmem>>, %arg3: memref<400x1xf32, #tpu.memory_space<vmem>>, %arg4: memref<400x1xf32, #tpu.memory_space<vmem>>, %arg5: memref<400x49xf32, #tpu.memory_space<vmem>>) attributes {dimension_semantics = [], scalar_prefetch = 0 : i64, scratch_operands = 0 : i64, tpu.core_type = #tpu.core_type<tc>} {
    %c0 = arith.constant 0 : index
    %c0_0 = arith.constant 0 : index
    %0 = vector.load %arg1[%c0, %c0_0] : memref<400x160xf32, #tpu.memory_space<vmem>>, vector<400x160xf32>
    %c0_1 = arith.constant 0 : index
    %c0_2 = arith.constant 0 : index
    %1 = vector.load %arg0[%c0_1, %c0_2] : memref<160x49xf32, #tpu.memory_space<vmem>>, vector<160x49xf32>
    %cst = arith.constant dense<0.000000e+00> : vector<400x49xf32>
    %2 = tpu.matmul %0, %1, %cst {dimension_numbers = #tpu.dot_dimension_numbers<[1], [0], [0], [1], [0, 0, 1, 1], [], []>} : vector<400x160xf32>, vector<160x49xf32>, vector<400x49xf32> -> vector<400x49xf32>
    %cst_3 = arith.constant dense<0.000000e+00> : vector<400xf32>
    %3 = vector.multi_reduction <add>, %2, %cst_3 [1] : vector<400x49xf32> to vector<400xf32>
    %4 = vector.shape_cast %3 : vector<400xf32> to vector<400x1xf32>
    %cst_4 = arith.constant 0.0204081628 : f32
    %5 = vector.broadcast %cst_4 : f32 to vector<400x1xf32>
    %6 = arith.mulf %4, %5 : vector<400x1xf32>
    %7 = vector.broadcast %6 : vector<400x1xf32> to vector<400x49xf32>
    %8 = arith.subf %2, %7 : vector<400x49xf32>
    %9 = arith.mulf %8, %8 : vector<400x49xf32>
    %cst_5 = arith.constant dense<0.000000e+00> : vector<400xf32>
    %10 = vector.multi_reduction <add>, %9, %cst_5 [1] : vector<400x49xf32> to vector<400xf32>
    %11 = vector.shape_cast %10 : vector<400xf32> to vector<400x1xf32>
    %cst_6 = arith.constant 0.0204081628 : f32
    %12 = vector.broadcast %cst_6 : f32 to vector<400x1xf32>
    %13 = arith.mulf %11, %12 : vector<400x1xf32>
    %cst_7 = arith.constant 9.99999974E-6 : f32
    %14 = vector.broadcast %cst_7 : f32 to vector<400x1xf32>
    %15 = arith.addf %13, %14 : vector<400x1xf32>
    %16 = math.rsqrt %15 : vector<400x1xf32>
    %c0_8 = arith.constant 0 : index
    %c0_9 = arith.constant 0 : index
    %17 = vector.load %arg3[%c0_8, %c0_9] : memref<400x1xf32, #tpu.memory_space<vmem>>, vector<400x1xf32>
    %18 = arith.mulf %16, %17 : vector<400x1xf32>
    %19 = vector.broadcast %18 : vector<400x1xf32> to vector<400x49xf32>
    %20 = arith.mulf %8, %19 : vector<400x49xf32>
    %c0_10 = arith.constant 0 : index
    %c0_11 = arith.constant 0 : index
    %21 = vector.load %arg4[%c0_10, %c0_11] : memref<400x1xf32, #tpu.memory_space<vmem>>, vector<400x1xf32>
    %22 = vector.broadcast %21 : vector<400x1xf32> to vector<400x49xf32>
    %23 = arith.addf %20, %22 : vector<400x49xf32>
    %c0_12 = arith.constant 0 : index
    %c0_13 = arith.constant 0 : index
    %24 = vector.load %arg2[%c0_12, %c0_13] : memref<400x49xf32, #tpu.memory_space<vmem>>, vector<400x49xf32>
    %25 = arith.addf %23, %24 : vector<400x49xf32>
    %cst_14 = arith.constant 0.000000e+00 : f32
    %26 = vector.broadcast %cst_14 : f32 to vector<400x49xf32>
    %27 = arith.maximumf %25, %26 : vector<400x49xf32>
    %c0_15 = arith.constant 0 : index
    %c0_16 = arith.constant 0 : index
    %28 = vector.load %arg5[%c0_15, %c0_16] : memref<400x49xf32, #tpu.memory_space<vmem>>, vector<400x49xf32>
    tpu.vector_store %arg5[%c0_15, %c0_16], %27 {strides = array<i32>} : memref<400x49xf32, #tpu.memory_space<vmem>>, vector<400x49xf32>,
    return
  }
}

</mosaic_0001>

<llo_original>
// kernel: conv_bn_add_relu.1
$region0: #{conv_bn_add_relu.1}
  #allocation0 [shape = 'u32[]', space=smem, size = 0x4, offset = 0x4, fixed_abs, tag = 'smem constant byte address 0x4 - core index']
  #allocation1 [shape = 'u32[72,128]{1,0:T(1,128)}', space=vmem, size = 0x9000, scoped, tag = 'internal scratch']
  %s0 = inlined_call_operand.vmem [shape: f32[160,49], index: 0, kind: input, shape index: {}]
  %s1 = inlined_call_operand.vmem [shape: f32[400,160], index: 1, kind: input, shape index: {}]
  %s2 = inlined_call_operand.vmem [shape: f32[400,49], index: 2, kind: input, shape index: {}]
  %s3 = inlined_call_operand.vmem [shape: f32[400,1], index: 3, kind: input, shape index: {}]
  %s4 = inlined_call_operand.vmem [shape: f32[400,1], index: 4, kind: input, shape index: {}]
  %s5 = inlined_call_operand.vmem [shape: f32[400,49], index: 5, kind: output, shape index: {}]
  %s6 = sld [smem:[#allocation0]]
  $region30: #{conv_bn_add_relu.1} parent=0
    _
  %s8 = ssub.s32 1, %s6
  %s9 = scalar_select 0, %s8, %s6
  // Predicated region
  $region2: #{conv_bn_add_relu.1} parent=0 // pred_check
    _
  $region3: #{conv_bn_add_relu.1} parent=0 // pred_check_branch
    %11 = sbr.rel (0) target = $region5
  $region4: #{conv_bn_add_relu.1} parent=0 // pred_region
    _
  $region5: #{conv_bn_add_relu.1} parent=0 // pred_fallthru
    _
  // Predicated region
  $region6: #{conv_bn_add_relu.1} parent=0 // pred_check
    _
  $region7: #{conv_bn_add_relu.1} parent=0 // pred_check_branch
    %13 = sbr.rel (0) target = $region9
  $region8: #{conv_bn_add_relu.1} parent=0 // pred_region
    _
  $region9: #{conv_bn_add_relu.1} parent=0 // pred_fallthru
    _
  // Predicated region
  $region10: #{conv_bn_add_relu.1} parent=0 // pred_check
    _
  $region11: #{conv_bn_add_relu.1} parent=0 // pred_check_branch
    %15 = sbr.rel (0) target = $region13
  $region12: #{conv_bn_add_relu.1} parent=0 // pred_region
    _
  $region13: #{conv_bn_add_relu.1} parent=0 // pred_fallthru
    _
  // Predicated region
  $region14: #{conv_bn_add_relu.1} parent=0 // pred_check
    _
  $region15: #{conv_bn_add_relu.1} parent=0 // pred_check_branch
    %17 = sbr.rel (0) target = $region17
  $region16: #{conv_bn_add_relu.1} parent=0 // pred_region
    _
  $region17: #{conv_bn_add_relu.1} parent=0 // pred_fallthru
    _
  // Predicated region
  $region18: #{conv_bn_add_relu.1} parent=0 // pred_check
    _
  $region19: #{conv_bn_add_relu.1} parent=0 // pred_check_branch
    %19 = sbr.rel (0) target = $region21
  $region20: #{conv_bn_add_relu.1} parent=0 // pred_region
    _
  $region21: #{conv_bn_add_relu.1} parent=0 // pred_fallthru
    _
  %v20 = vld [vmem:[%s1] sm:$0xff]
  %v21 = vld [vmem:[%s1 + $0x8] sm:$0xff]
  %v22 = vld [vmem:[%s1 + $0x10] sm:$0xff]
  %v23 = vld [vmem:[%s1 + $0x18] sm:$0xff]
  %v24 = vld [vmem:[%s1 + $0x20] sm:$0xff]
  %v25 = vld [vmem:[%s1 + $0x28] sm:$0xff]
  %v26 = vld [vmem:[%s1 + $0x30] sm:$0xff]
  %v27 = vld [vmem:[%s1 + $0x38] sm:$0xff]
  %v28 = vld [vmem:[%s1 + $0x40] sm:$0xff]
  %v29 = vld [vmem:[%s1 + $0x48] sm:$0xff]
  %v30 = vld [vmem:[%s1 + $0x50] sm:$0xff]
  %v31 = vld [vmem:[%s1 + $0x58] sm:$0xff]
  %v32 = vld [vmem:[%s1 + $0x60] sm:$0xff]
  %v33 = vld [vmem:[%s1 + $0x68] sm:$0xff]
  %v34 = vld [vmem:[%s1 + $0x70] sm:$0xff]
  %v35 = vld [vmem:[%s1 + $0x78] sm:$0xff]
  %v36 = vld [vmem:[%s1 + $0x80] sm:$0xff]
  %v37 = vld [vmem:[%s1 + $0x88] sm:$0xff]
  %v38 = vld [vmem:[%s1 + $0x90] sm:$0xff]
  %v39 = vld [vmem:[%s1 + $0x98] sm:$0xff]
  %v40 = vld [vmem:[%s1 + $0xa0] sm:$0xff]
  %v41 = vld [vmem:[%s1 + $0xa8] sm:$0xff]
  %v42 = vld [vmem:[%s1 + $0xb0] sm:$0xff]
  %v43 = vld [vmem:[%s1 + $0xb8] sm:$0xff]
  %v44 = vld [vmem:[%s1 + $0xc0] sm:$0xff]
  %v45 = vld [vmem:[%s1 + $0xc8] sm:$0xff]
  %v46 = vld [vmem:[%s1 + $0xd0] sm:$0xff]
  %v47 = vld [vmem:[%s1 + $0xd8] sm:$0xff]
  %v48 = vld [vmem:[%s1 + $0xe0] sm:$0xff]
  %v49 = vld [vmem:[%s1 + $0xe8] sm:$0xff]
  %v50 = vld [vmem:[%s1 + $0xf0] sm:$0xff]
  %v51 = vld [vmem:[%s1 + $0xf8] sm:$0xff]
  %v52 = vld [vmem:[%s1 + $0x100] sm:$0xff]
  %v53 = vld [vmem:[%s1 + $0x108] sm:$0xff]
  %v54 = vld [vmem:[%s1 + $0x110] sm:$0xff]
  %v55 = vld [vmem:[%s1 + $0x118] sm:$0xff]
  %v56 = vld [vmem:[%s1 + $0x120] sm:$0xff]
  %v57 = vld [vmem:[%s1 + $0x128] sm:$0xff]
  %v58 = vld [vmem:[%s1 + $0x130] sm:$0xff]
  %v59 = vld [vmem:[%s1 + $0x138] sm:$0xff]
  %v60 = vld [vmem:[%s1 + $0x140] sm:$0xff]
  %v61 = vld [vmem:[%s1 + $0x148] sm:$0xff]
  %v62 = vld [vmem:[%s1 + $0x150] sm:$0xff]
  %v63 = vld [vmem:[%s1 + $0x158] sm:$0xff]
  %v64 = vld [vmem:[%s1 + $0x160] sm:$0xff]
  %v65 = vld [vmem:[%s1 + $0x168] sm:$0xff]
  %v66 = vld [vmem:[%s1 + $0x170] sm:$0xff]
  %v67 = vld [vmem:[%s1 + $0x178] sm:$0xff]
  %v68 = vld [vmem:[%s1 + $0x180] sm:$0xff]
  %v69 = vld [vmem:[%s1 + $0x188] sm:$0xff]
  %v70 = vld [vmem:[%s1 + $0x190] sm:$0xff]
  %v71 = vld [vmem:[%s1 + $0x198] sm:$0xff]
  %v72 = vld [vmem:[%s1 + $0x1a0] sm:$0xff]
  %v73 = vld [vmem:[%s1 + $0x1a8] sm:$0xff]
  %v74 = vld [vmem:[%s1 + $0x1b0] sm:$0xff]
  %v75 = vld [vmem:[%s1 + $0x1b8] sm:$0xff]
  %v76 = vld [vmem:[%s1 + $0x1c0] sm:$0xff]
  %v77 = vld [vmem:[%s1 + $0x1c8] sm:$0xff]
  %v78 = vld [vmem:[%s1 + $0x1d0] sm:$0xff]
  %v79 = vld [vmem:[%s1 + $0x1d8] sm:$0xff]
  %v80 = vld [vmem:[%s1 + $0x1e0] sm:$0xff]
  %v81 = vld [vmem:[%s1 + $0x1e8] sm:$0xff]
  %v82 = vld [vmem:[%s1 + $0x1f0] sm:$0xff]
  %v83 = vld [vmem:[%s1 + $0x1f8] sm:$0xff]
  %v84 = vld [vmem:[%s1 + $0x200] sm:$0xff]
  %v85 = vld [vmem:[%s1 + $0x208] sm:$0xff]
  %v86 = vld [vmem:[%s1 + $0x210] sm:$0xff]
  %v87 = vld [vmem:[%s1 + $0x218] sm:$0xff]
  %v88 = vld [vmem:[%s1 + $0x220] sm:$0xff]
  %v89 = vld [vmem:[%s1 + $0x228] sm:$0xff]
  %v90 = vld [vmem:[%s1 + $0x230] sm:$0xff]
  %v91 = vld [vmem:[%s1 + $0x238] sm:$0xff]
  %v92 = vld [vmem:[%s1 + $0x240] sm:$0xff]
  %v93 = vld [vmem:[%s1 + $0x248] sm:$0xff]
  %v94 = vld [vmem:[%s1 + $0x250] sm:$0xff]
  %v95 = vld [vmem:[%s1 + $0x258] sm:$0xff]
  %v96 = vld [vmem:[%s1 + $0x260] sm:$0xff]
  %v97 = vld [vmem:[%s1 + $0x268] sm:$0xff]
  %v98 = vld [vmem:[%s1 + $0x270] sm:$0xff]
  %v99 = vld [vmem:[%s1 + $0x278] sm:$0xff]
  %v100 = vld [vmem:[%s1 + $0x280] sm:$0xff]
  %v101 = vld [vmem:[%s1 + $0x288] sm:$0xff]
  %v102 = vld [vmem:[%s1 + $0x290] sm:$0xff]
  %v103 = vld [vmem:[%s1 + $0x298] sm:$0xff]
  %v104 = vld [vmem:[%s1 + $0x2a0] sm:$0xff]
  %v105 = vld [vmem:[%s1 + $0x2a8] sm:$0xff]
  %v106 = vld [vmem:[%s1 + $0x2b0] sm:$0xff]
  %v107 = vld [vmem:[%s1 + $0x2b8] sm:$0xff]
  %v108 = vld [vmem:[%s1 + $0x2c0] sm:$0xff]
  %v109 = vld [vmem:[%s1 + $0x2c8] sm:$0xff]
  %v110 = vld [vmem:[%s1 + $0x2d0] sm:$0xff]
  %v111 = vld [vmem:[%s1 + $0x2d8] sm:$0xff]
  %v112 = vld [vmem:[%s1 + $0x2e0] sm:$0xff]
  %v113 = vld [vmem:[%s1 + $0x2e8] sm:$0xff]
  %v114 = vld [vmem:[%s1 + $0x2f0] sm:$0xff]
  %v115 = vld [vmem:[%s1 + $0x2f8] sm:$0xff]
  %v116 = vld [vmem:[%s1 + $0x300] sm:$0xff]
  %v117 = vld [vmem:[%s1 + $0x308] sm:$0xff]
  %v118 = vld [vmem:[%s1 + $0x310] sm:$0xff]
  %v119 = vld [vmem:[%s1 + $0x318] sm:$0xff]
  %v120 = vld [vmem:[%s0] sm:$0xff]
  %v121 = vld [vmem:[%s0 + $0x8] sm:$0xff]
  %v122 = vld [vmem:[%s0 + $0x10] sm:$0xff]
  %v123 = vld [vmem:[%s0 + $0x18] sm:$0xff]
  %v124 = vld [vmem:[%s0 + $0x20] sm:$0xff]
  %v125 = vld [vmem:[%s0 + $0x28] sm:$0xff]
  %v126 = vld [vmem:[%s0 + $0x30] sm:$0xff]
  %v127 = vld [vmem:[%s0 + $0x38] sm:$0xff]
  %v128 = vld [vmem:[%s0 + $0x40] sm:$0xff]
  %v129 = vld [vmem:[%s0 + $0x48] sm:$0xff]
  %v130 = vld [vmem:[%s0 + $0x50] sm:$0xff]
  %v131 = vld [vmem:[%s0 + $0x58] sm:$0xff]
  %v132 = vld [vmem:[%s0 + $0x60] sm:$0xff]
  %v133 = vld [vmem:[%s0 + $0x68] sm:$0xff]
  %v134 = vld [vmem:[%s0 + $0x70] sm:$0xff]
  %v135 = vld [vmem:[%s0 + $0x78] sm:$0xff]
  %v136 = vld [vmem:[%s0 + $0x80] sm:$0xff]
  %v137 = vld [vmem:[%s0 + $0x88] sm:$0xff]
  %v138 = vld [vmem:[%s0 + $0x90] sm:$0xff]
  %v139 = vld [vmem:[%s0 + $0x98] sm:$0xff]
  %vm140 = vcmask 261120
  %v142 = vsel %vm140, %v21, 0
  %v145 = vsel %vm140, %v23, 0
  %v148 = vsel %vm140, %v25, 0
  %v151 = vsel %vm140, %v27, 0
  %v154 = vsel %vm140, %v29, 0
  %v157 = vsel %vm140, %v31, 0
  %v160 = vsel %vm140, %v33, 0
  %v163 = vsel %vm140, %v35, 0
  %v166 = vsel %vm140, %v37, 0
  %v169 = vsel %vm140, %v39, 0
  %v172 = vsel %vm140, %v41, 0
  %v175 = vsel %vm140, %v43, 0
  %v178 = vsel %vm140, %v45, 0
  %v181 = vsel %vm140, %v47, 0
  %v184 = vsel %vm140, %v49, 0
  %v187 = vsel %vm140, %v51, 0
  %v190 = vsel %vm140, %v53, 0
  %v193 = vsel %vm140, %v55, 0
  %v196 = vsel %vm140, %v57, 0
  %v199 = vsel %vm140, %v59, 0
  %v202 = vsel %vm140, %v61, 0
  %v205 = vsel %vm140, %v63, 0
  %v208 = vsel %vm140, %v65, 0
  %v211 = vsel %vm140, %v67, 0
  %v214 = vsel %vm140, %v69, 0
  %v217 = vsel %vm140, %v71, 0
  %v220 = vsel %vm140, %v73, 0
  %v223 = vsel %vm140, %v75, 0
  %v226 = vsel %vm140, %v77, 0
  %v229 = vsel %vm140, %v79, 0
  %v232 = vsel %vm140, %v81, 0
  %v235 = vsel %vm140, %v83, 0
  %v238 = vsel %vm140, %v85, 0
  %v241 = vsel %vm140, %v87, 0
  %v244 = vsel %vm140, %v89, 0
  %v247 = vsel %vm140, %v91, 0
  %v250 = vsel %vm140, %v93, 0
  %v253 = vsel %vm140, %v95, 0
  %v256 = vsel %vm140, %v97, 0
  %v259 = vsel %vm140, %v99, 0
  %v262 = vsel %vm140, %v101, 0
  %v265 = vsel %vm140, %v103, 0
  %v268 = vsel %vm140, %v105, 0
  %v271 = vsel %vm140, %v107, 0
  %v274 = vsel %vm140, %v109, 0
  %v277 = vsel %vm140, %v111, 0
  %v280 = vsel %vm140, %v113, 0
  %v283 = vsel %vm140, %v115, 0
  %v286 = vsel %vm140, %v117, 0
  %v289 = vsel %vm140, %v119, 0
  %291 = vmatpush.msra.mxu0 %v135
  %292 = vmatpush.msra.mxu0 %v134
  %293 = vmatpush.msra.mxu0 %v133
  %294 = vmatpush.msra.mxu0 %v132
  %295 = vmatpush.msra.mxu0 %v131
  %296 = vmatpush.msra.mxu0 %v130
  %297 = vmatpush.msra.mxu0 %v129
  %298 = vmatpush.msra.mxu0 %v128
  %299 = vmatpush.msra.mxu0 %v127
  %300 = vmatpush.msra.mxu0 %v126
  %301 = vmatpush.msra.mxu0 %v125
  %302 = vmatpush.msra.mxu0 %v124
  %303 = vmatpush.msra.mxu0 %v123
  %304 = vmatpush.msra.mxu0 %v122
  %305 = vmatpush.msra.mxu0 %v121
  %306 = vmatpush.msra.mxu0 %v120
  %307 = vmatmul.f32.gmra.mxu0 %v20
  %v308 = vpop.f32.mrf.mxu0
  %v309 = vadd.f32 0.0, %v308
  %310 = vmatmul.f32.gmra.mxu0 %v22
  %v311 = vpop.f32.mrf.mxu0
  %v312 = vadd.f32 0.0, %v311
  %313 = vmatmul.f32.gmra.mxu0 %v24
  %v314 = vpop.f32.mrf.mxu0
  %v315 = vadd.f32 0.0, %v314
  %316 = vmatmul.f32.gmra.mxu0 %v26
  %v317 = vpop.f32.mrf.mxu0
  %v318 = vadd.f32 0.0, %v317
  %319 = vmatmul.f32.gmra.mxu0 %v28
  %v320 = vpop.f32.mrf.mxu0
  %v321 = vadd.f32 0.0, %v320
  %322 = vmatmul.f32.gmra.mxu0 %v30
  %v323 = vpop.f32.mrf.mxu0
  %v324 = vadd.f32 0.0, %v323
  %325 = vmatmul.f32.gmra.mxu0 %v32
  %v326 = vpop.f32.mrf.mxu0
  %v327 = vadd.f32 0.0, %v326
  %328 = vmatmul.f32.gmra.mxu0 %v34
  %v329 = vpop.f32.mrf.mxu0
  %v330 = vadd.f32 0.0, %v329
  %331 = vmatmul.f32.gmra.mxu0 %v36
  %v332 = vpop.f32.mrf.mxu0
  %v333 = vadd.f32 0.0, %v332
  %334 = vmatmul.f32.gmra.mxu0 %v38
  %v335 = vpop.f32.mrf.mxu0
  %v336 = vadd.f32 0.0, %v335
  %337 = vmatmul.f32.gmra.mxu0 %v40
  %v338 = vpop.f32.mrf.mxu0
  %v339 = vadd.f32 0.0, %v338
  %340 = vmatmul.f32.gmra.mxu0 %v42
  %v341 = vpop.f32.mrf.mxu0
  %v342 = vadd.f32 0.0, %v341
  %343 = vmatmul.f32.gmra.mxu0 %v44
  %v344 = vpop.f32.mrf.mxu0
  %v345 = vadd.f32 0.0, %v344
  %346 = vmatmul.f32.gmra.mxu0 %v46
  %v347 = vpop.f32.mrf.mxu0
  %v348 = vadd.f32 0.0, %v347
  %349 = vmatmul.f32.gmra.mxu0 %v48
  %v350 = vpop.f32.mrf.mxu0
  %v351 = vadd.f32 0.0, %v350
  %352 = vmatmul.f32.gmra.mxu0 %v50
  %v353 = vpop.f32.mrf.mxu0
  %v354 = vadd.f32 0.0, %v353
  %355 = vmatmul.f32.gmra.mxu0 %v52
  %v356 = vpop.f32.mrf.mxu0
  %v357 = vadd.f32 0.0, %v356
  %358 = vmatmul.f32.gmra.mxu0 %v54
  %v359 = vpop.f32.mrf.mxu0
  %v360 = vadd.f32 0.0, %v359
  %361 = vmatmul.f32.gmra.mxu0 %v56
  %v362 = vpop.f32.mrf.mxu0
  %v363 = vadd.f32 0.0, %v362
  %364 = vmatmul.f32.gmra.mxu0 %v58
  %v365 = vpop.f32.mrf.mxu0
  %v366 = vadd.f32 0.0, %v365
  %367 = vmatmul.f32.gmra.mxu0 %v60
  %v368 = vpop.f32.mrf.mxu0
  %v369 = vadd.f32 0.0, %v368
  %370 = vmatmul.f32.gmra.mxu0 %v62
  %v371 = vpop.f32.mrf.mxu0
  %v372 = vadd.f32 0.0, %v371
  %373 = vmatmul.f32.gmra.mxu0 %v64
  %v374 = vpop.f32.mrf.mxu0
  %v375 = vadd.f32 0.0, %v374
  %376 = vmatmul.f32.gmra.mxu0 %v66
  %v377 = vpop.f32.mrf.mxu0
  %v378 = vadd.f32 0.0, %v377
  %379 = vmatmul.f32.gmra.mxu0 %v68
  %v380 = vpop.f32.mrf.mxu0
  %v381 = vadd.f32 0.0, %v380
  %382 = vmatmul.f32.gmra.mxu0 %v70
  %v383 = vpop.f32.mrf.mxu0
  %v384 = vadd.f32 0.0, %v383
  %385 = vmatmul.f32.gmra.mxu0 %v72
  %v386 = vpop.f32.mrf.mxu0
  %v387 = vadd.f32 0.0, %v386
  %388 = vmatmul.f32.gmra.mxu0 %v74
  %v389 = vpop.f32.mrf.mxu0
  %v390 = vadd.f32 0.0, %v389
  %391 = vmatmul.f32.gmra.mxu0 %v76
  %v392 = vpop.f32.mrf.mxu0
  %v393 = vadd.f32 0.0, %v392
  %394 = vmatmul.f32.gmra.mxu0 %v78
  %v395 = vpop.f32.mrf.mxu0
  %v396 = vadd.f32 0.0, %v395
  %397 = vmatmul.f32.gmra.mxu0 %v80
  %v398 = vpop.f32.mrf.mxu0
  %v399 = vadd.f32 0.0, %v398
  %400 = vmatmul.f32.gmra.mxu0 %v82
  %v401 = vpop.f32.mrf.mxu0
  %v402 = vadd.f32 0.0, %v401
  %403 = vmatmul.f32.gmra.mxu0 %v84
  %v404 = vpop.f32.mrf.mxu0
  %v405 = vadd.f32 0.0, %v404
  %406 = vmatmul.f32.gmra.mxu0 %v86
  %v407 = vpop.f32.mrf.mxu0
  %v408 = vadd.f32 0.0, %v407
  %409 = vmatmul.f32.gmra.mxu0 %v88
  %v410 = vpop.f32.mrf.mxu0
  %v411 = vadd.f32 0.0, %v410
  %412 = vmatmul.f32.gmra.mxu0 %v90
  %v413 = vpop.f32.mrf.mxu0
  %v414 = vadd.f32 0.0, %v413
  %415 = vmatmul.f32.gmra.mxu0 %v92
  %v416 = vpop.f32.mrf.mxu0
  %v417 = vadd.f32 0.0, %v416
  %418 = vmatmul.f32.gmra.mxu0 %v94
  %v419 = vpop.f32.mrf.mxu0
  %v420 = vadd.f32 0.0, %v419
  %421 = vmatmul.f32.gmra.mxu0 %v96
  %v422 = vpop.f32.mrf.mxu0
  %v423 = vadd.f32 0.0, %v422
  %424 = vmatmul.f32.gmra.mxu0 %v98
  %v425 = vpop.f32.mrf.mxu0
  %v426 = vadd.f32 0.0, %v425
  %427 = vmatmul.f32.gmra.mxu0 %v100
  %v428 = vpop.f32.mrf.mxu0
  %v429 = vadd.f32 0.0, %v428
  %430 = vmatmul.f32.gmra.mxu0 %v102
  %v431 = vpop.f32.mrf.mxu0
  %v432 = vadd.f32 0.0, %v431
  %433 = vmatmul.f32.gmra.mxu0 %v104
  %v434 = vpop.f32.mrf.mxu0
  %v435 = vadd.f32 0.0, %v434
  %436 = vmatmul.f32.gmra.mxu0 %v106
  %v437 = vpop.f32.mrf.mxu0
  %v438 = vadd.f32 0.0, %v437
  %439 = vmatmul.f32.gmra.mxu0 %v108
  %v440 = vpop.f32.mrf.mxu0
  %v441 = vadd.f32 0.0, %v440
  %442 = vmatmul.f32.gmra.mxu0 %v110
  %v443 = vpop.f32.mrf.mxu0
  %v444 = vadd.f32 0.0, %v443
  %445 = vmatmul.f32.gmra.mxu0 %v112
  %v446 = vpop.f32.mrf.mxu0
  %v447 = vadd.f32 0.0, %v446
  %448 = vmatmul.f32.gmra.mxu0 %v114
  %v449 = vpop.f32.mrf.mxu0
  %v450 = vadd.f32 0.0, %v449
  %451 = vmatmul.f32.gmra.mxu0 %v116
  %v452 = vpop.f32.mrf.mxu0
  %v453 = vadd.f32 0.0, %v452
  %454 = vmatmul.f32.gmra.mxu0 %v118
  %v455 = vpop.f32.mrf.mxu0
  %v456 = vadd.f32 0.0, %v455
  %457 = vdwg.mxu0
  %458 = vmatpush.msra.mxu0 0.0
  %459 = vmatpush.msra.mxu0 0.0
  %460 = vmatpush.msra.mxu0 0.0
  %461 = vmatpush.msra.mxu0 0.0
  %462 = vmatpush.msra.mxu0 0.0
  %463 = vmatpush.msra.mxu0 0.0
  %464 = vmatpush.msra.mxu0 0.0
  %465 = vmatpush.msra.mxu0 0.0
  %466 = vmatpush.msra.mxu0 0.0
  %467 = vmatpush.msra.mxu0 0.0
  %468 = vmatpush.msra.mxu0 0.0
  %469 = vmatpush.msra.mxu0 0.0
  %470 = vmatpush.msra.mxu0 %v139
  %471 = vmatpush.msra.mxu0 %v138
  %472 = vmatpush.msra.mxu0 %v137
  %473 = vmatpush.msra.mxu0 %v136
  %474 = vmatmul.f32.gmra.mxu0 %v142
  %v475 = vpop.f32.mrf.mxu0
  %v476 = vadd.f32 %v309, %v475
  %477 = vmatmul.f32.gmra.mxu0 %v145
  %v478 = vpop.f32.mrf.mxu0
  %v479 = vadd.f32 %v312, %v478
  %480 = vmatmul.f32.gmra.mxu0 %v148
  %v481 = vpop.f32.mrf.mxu0
  %v482 = vadd.f32 %v315, %v481
  %483 = vmatmul.f32.gmra.mxu0 %v151
  %v484 = vpop.f32.mrf.mxu0
  %v485 = vadd.f32 %v318, %v484
  %486 = vmatmul.f32.gmra.mxu0 %v154
  %v487 = vpop.f32.mrf.mxu0
  %v488 = vadd.f32 %v321, %v487
  %489 = vmatmul.f32.gmra.mxu0 %v157
  %v490 = vpop.f32.mrf.mxu0
  %v491 = vadd.f32 %v324, %v490
  %492 = vmatmul.f32.gmra.mxu0 %v160
  %v493 = vpop.f32.mrf.mxu0
  %v494 = vadd.f32 %v327, %v493
  %495 = vmatmul.f32.gmra.mxu0 %v163
  %v496 = vpop.f32.mrf.mxu0
  %v497 = vadd.f32 %v330, %v496
  %498 = vmatmul.f32.gmra.mxu0 %v166
  %v499 = vpop.f32.mrf.mxu0
  %v500 = vadd.f32 %v333, %v499
  %501 = vmatmul.f32.gmra.mxu0 %v169
  %v502 = vpop.f32.mrf.mxu0
  %v503 = vadd.f32 %v336, %v502
  %504 = vmatmul.f32.gmra.mxu0 %v172
  %v505 = vpop.f32.mrf.mxu0
  %v506 = vadd.f32 %v339, %v505
  %507 = vmatmul.f32.gmra.mxu0 %v175
  %v508 = vpop.f32.mrf.mxu0
  %v509 = vadd.f32 %v342, %v508
  %510 = vmatmul.f32.gmra.mxu0 %v178
  %v511 = vpop.f32.mrf.mxu0
  %v512 = vadd.f32 %v345, %v511
  %513 = vmatmul.f32.gmra.mxu0 %v181
  %v514 = vpop.f32.mrf.mxu0
  %v515 = vadd.f32 %v348, %v514
  %516 = vmatmul.f32.gmra.mxu0 %v184
  %v517 = vpop.f32.mrf.mxu0
  %v518 = vadd.f32 %v351, %v517
  %519 = vmatmul.f32.gmra.mxu0 %v187
  %v520 = vpop.f32.mrf.mxu0
  %v521 = vadd.f32 %v354, %v520
  %522 = vmatmul.f32.gmra.mxu0 %v190
  %v523 = vpop.f32.mrf.mxu0
  %v524 = vadd.f32 %v357, %v523
  %525 = vmatmul.f32.gmra.mxu0 %v193
  %v526 = vpop.f32.mrf.mxu0
  %v527 = vadd.f32 %v360, %v526
  %528 = vmatmul.f32.gmra.mxu0 %v196
  %v529 = vpop.f32.mrf.mxu0
  %v530 = vadd.f32 %v363, %v529
  %531 = vmatmul.f32.gmra.mxu0 %v199
  %v532 = vpop.f32.mrf.mxu0
  %v533 = vadd.f32 %v366, %v532
  %534 = vmatmul.f32.gmra.mxu0 %v202
  %v535 = vpop.f32.mrf.mxu0
  %v536 = vadd.f32 %v369, %v535
  %537 = vmatmul.f32.gmra.mxu0 %v205
  %v538 = vpop.f32.mrf.mxu0
  %v539 = vadd.f32 %v372, %v538
  %540 = vmatmul.f32.gmra.mxu0 %v208
  %v541 = vpop.f32.mrf.mxu0
  %v542 = vadd.f32 %v375, %v541
  %543 = vmatmul.f32.gmra.mxu0 %v211
  %v544 = vpop.f32.mrf.mxu0
  %v545 = vadd.f32 %v378, %v544
  %546 = vmatmul.f32.gmra.mxu0 %v214
  %v547 = vpop.f32.mrf.mxu0
  %v548 = vadd.f32 %v381, %v547
  %549 = vmatmul.f32.gmra.mxu0 %v217
  %v550 = vpop.f32.mrf.mxu0
  %v551 = vadd.f32 %v384, %v550
  %552 = vmatmul.f32.gmra.mxu0 %v220
  %v553 = vpop.f32.mrf.mxu0
  %v554 = vadd.f32 %v387, %v553
  %555 = vmatmul.f32.gmra.mxu0 %v223
  %v556 = vpop.f32.mrf.mxu0
  %v557 = vadd.f32 %v390, %v556
  %558 = vmatmul.f32.gmra.mxu0 %v226
  %v559 = vpop.f32.mrf.mxu0
  %v560 = vadd.f32 %v393, %v559
  %561 = vmatmul.f32.gmra.mxu0 %v229
  %v562 = vpop.f32.mrf.mxu0
  %v563 = vadd.f32 %v396, %v562
  %564 = vmatmul.f32.gmra.mxu0 %v232
  %v565 = vpop.f32.mrf.mxu0
  %v566 = vadd.f32 %v399, %v565
  %567 = vmatmul.f32.gmra.mxu0 %v235
  %v568 = vpop.f32.mrf.mxu0
  %v569 = vadd.f32 %v402, %v568
  %570 = vmatmul.f32.gmra.mxu0 %v238
  %v571 = vpop.f32.mrf.mxu0
  %v572 = vadd.f32 %v405, %v571
  %573 = vmatmul.f32.gmra.mxu0 %v241
  %v574 = vpop.f32.mrf.mxu0
  %v575 = vadd.f32 %v408, %v574
  %576 = vmatmul.f32.gmra.mxu0 %v244
  %v577 = vpop.f32.mrf.mxu0
  %v578 = vadd.f32 %v411, %v577
  %579 = vmatmul.f32.gmra.mxu0 %v247
  %v580 = vpop.f32.mrf.mxu0
  %v581 = vadd.f32 %v414, %v580
  %582 = vmatmul.f32.gmra.mxu0 %v250
  %v583 = vpop.f32.mrf.mxu0
  %v584 = vadd.f32 %v417, %v583
  %585 = vmatmul.f32.gmra.mxu0 %v253
  %v586 = vpop.f32.mrf.mxu0
  %v587 = vadd.f32 %v420, %v586
  %588 = vmatmul.f32.gmra.mxu0 %v256
  %v589 = vpop.f32.mrf.mxu0
  %v590 = vadd.f32 %v423, %v589
  %591 = vmatmul.f32.gmra.mxu0 %v259
  %v592 = vpop.f32.mrf.mxu0
  %v593 = vadd.f32 %v426, %v592
  %594 = vmatmul.f32.gmra.mxu0 %v262
  %v595 = vpop.f32.mrf.mxu0
  %v596 = vadd.f32 %v429, %v595
  %597 = vmatmul.f32.gmra.mxu0 %v265
  %v598 = vpop.f32.mrf.mxu0
  %v599 = vadd.f32 %v432, %v598
  %600 = vmatmul.f32.gmra.mxu0 %v268
  %v601 = vpop.f32.mrf.mxu0
  %v602 = vadd.f32 %v435, %v601
  %603 = vmatmul.f32.gmra.mxu0 %v271
  %v604 = vpop.f32.mrf.mxu0
  %v605 = vadd.f32 %v438, %v604
  %606 = vmatmul.f32.gmra.mxu0 %v274
  %v607 = vpop.f32.mrf.mxu0
  %v608 = vadd.f32 %v441, %v607
  %609 = vmatmul.f32.gmra.mxu0 %v277
  %v610 = vpop.f32.mrf.mxu0
  %v611 = vadd.f32 %v444, %v610
  %612 = vmatmul.f32.gmra.mxu0 %v280
  %v613 = vpop.f32.mrf.mxu0
  %v614 = vadd.f32 %v447, %v613
  %615 = vmatmul.f32.gmra.mxu0 %v283
  %v616 = vpop.f32.mrf.mxu0
  %v617 = vadd.f32 %v450, %v616
  %618 = vmatmul.f32.gmra.mxu0 %v286
  %v619 = vpop.f32.mrf.mxu0
  %v620 = vadd.f32 %v453, %v619
  %621 = vmatmul.f32.gmra.mxu0 %v289
  %v622 = vpop.f32.mrf.mxu0
  %v623 = vadd.f32 %v456, %v622
  %624 = vdwg.mxu0
  %vm625 = vcmask 400384
  %v626 = vsel %vm625, %v476, 0.0
  %627 = vadd.xlane.f32.xlu0 %v626
  %v628 = vpop.xlane.xlu0 %627
  %v629 = vsel %vm625, %v479, 0.0
  %630 = vadd.xlane.f32.xlu0 %v629
  %v631 = vpop.xlane.xlu0 %630
  %v632 = vsel %vm625, %v482, 0.0
  %633 = vadd.xlane.f32.xlu0 %v632
  %v634 = vpop.xlane.xlu0 %633
  %v635 = vsel %vm625, %v485, 0.0
  %636 = vadd.xlane.f32.xlu0 %v635
  %v637 = vpop.xlane.xlu0 %636
  %v638 = vsel %vm625, %v488, 0.0
  %639 = vadd.xlane.f32.xlu0 %v638
  %v640 = vpop.xlane.xlu0 %639
  %v641 = vsel %vm625, %v491, 0.0
  %642 = vadd.xlane.f32.xlu0 %v641
  %v643 = vpop.xlane.xlu0 %642
  %v644 = vsel %vm625, %v494, 0.0
  %645 = vadd.xlane.f32.xlu0 %v644
  %v646 = vpop.xlane.xlu0 %645
  %v647 = vsel %vm625, %v497, 0.0
  %648 = vadd.xlane.f32.xlu0 %v647
  %v649 = vpop.xlane.xlu0 %648
  %v650 = vsel %vm625, %v500, 0.0
  %651 = vadd.xlane.f32.xlu0 %v650
  %v652 = vpop.xlane.xlu0 %651
  %v653 = vsel %vm625, %v503, 0.0
  %654 = vadd.xlane.f32.xlu0 %v653
  %v655 = vpop.xlane.xlu0 %654
  %v656 = vsel %vm625, %v506, 0.0
  %657 = vadd.xlane.f32.xlu0 %v656
  %v658 = vpop.xlane.xlu0 %657
  %v659 = vsel %vm625, %v509, 0.0
  %660 = vadd.xlane.f32.xlu0 %v659
  %v661 = vpop.xlane.xlu0 %660
  %v662 = vsel %vm625, %v512, 0.0
  %663 = vadd.xlane.f32.xlu0 %v662
  %v664 = vpop.xlane.xlu0 %663
  %v665 = vsel %vm625, %v515, 0.0
  %666 = vadd.xlane.f32.xlu0 %v665
  %v667 = vpop.xlane.xlu0 %666
  %v668 = vsel %vm625, %v518, 0.0
  %669 = vadd.xlane.f32.xlu0 %v668
  %v670 = vpop.xlane.xlu0 %669
  %v671 = vsel %vm625, %v521, 0.0
  %672 = vadd.xlane.f32.xlu0 %v671
  %v673 = vpop.xlane.xlu0 %672
  %v674 = vsel %vm625, %v524, 0.0
  %675 = vadd.xlane.f32.xlu0 %v674
  %v676 = vpop.xlane.xlu0 %675
  %v677 = vsel %vm625, %v527, 0.0
  %678 = vadd.xlane.f32.xlu0 %v677
  %v679 = vpop.xlane.xlu0 %678
  %v680 = vsel %vm625, %v530, 0.0
  %681 = vadd.xlane.f32.xlu0 %v680
  %v682 = vpop.xlane.xlu0 %681
  %v683 = vsel %vm625, %v533, 0.0
  %684 = vadd.xlane.f32.xlu0 %v683
  %v685 = vpop.xlane.xlu0 %684
  %v686 = vsel %vm625, %v536, 0.0
  %687 = vadd.xlane.f32.xlu0 %v686
  %v688 = vpop.xlane.xlu0 %687
  %v689 = vsel %vm625, %v539, 0.0
  %690 = vadd.xlane.f32.xlu0 %v689
  %v691 = vpop.xlane.xlu0 %690
  %v692 = vsel %vm625, %v542, 0.0
  %693 = vadd.xlane.f32.xlu0 %v692
  %v694 = vpop.xlane.xlu0 %693
  %v695 = vsel %vm625, %v545, 0.0
  %696 = vadd.xlane.f32.xlu0 %v695
  %v697 = vpop.xlane.xlu0 %696
  %v698 = vsel %vm625, %v548, 0.0
  %699 = vadd.xlane.f32.xlu0 %v698
  %v700 = vpop.xlane.xlu0 %699
  %v701 = vsel %vm625, %v551, 0.0
  %702 = vadd.xlane.f32.xlu0 %v701
  %v703 = vpop.xlane.xlu0 %702
  %v704 = vsel %vm625, %v554, 0.0
  %705 = vadd.xlane.f32.xlu0 %v704
  %v706 = vpop.xlane.xlu0 %705
  %v707 = vsel %vm625, %v557, 0.0
  %708 = vadd.xlane.f32.xlu0 %v707
  %v709 = vpop.xlane.xlu0 %708
  %v710 = vsel %vm625, %v560, 0.0
  %711 = vadd.xlane.f32.xlu0 %v710
  %v712 = vpop.xlane.xlu0 %711
  %v713 = vsel %vm625, %v563, 0.0
  %714 = vadd.xlane.f32.xlu0 %v713
  %v715 = vpop.xlane.xlu0 %714
  %v716 = vsel %vm625, %v566, 0.0
  %717 = vadd.xlane.f32.xlu0 %v716
  %v718 = vpop.xlane.xlu0 %717
  %v719 = vsel %vm625, %v569, 0.0
  %720 = vadd.xlane.f32.xlu0 %v719
  %v721 = vpop.xlane.xlu0 %720
  %v722 = vsel %vm625, %v572, 0.0
  %723 = vadd.xlane.f32.xlu0 %v722
  %v724 = vpop.xlane.xlu0 %723
  %v725 = vsel %vm625, %v575, 0.0
  %726 = vadd.xlane.f32.xlu0 %v725
  %v727 = vpop.xlane.xlu0 %726
  %v728 = vsel %vm625, %v578, 0.0
  %729 = vadd.xlane.f32.xlu0 %v728
  %v730 = vpop.xlane.xlu0 %729
  %v731 = vsel %vm625, %v581, 0.0
  %732 = vadd.xlane.f32.xlu0 %v731
  %v733 = vpop.xlane.xlu0 %732
  %v734 = vsel %vm625, %v584, 0.0
  %735 = vadd.xlane.f32.xlu0 %v734
  %v736 = vpop.xlane.xlu0 %735
  %v737 = vsel %vm625, %v587, 0.0
  %738 = vadd.xlane.f32.xlu0 %v737
  %v739 = vpop.xlane.xlu0 %738
  %v740 = vsel %vm625, %v590, 0.0
  %741 = vadd.xlane.f32.xlu0 %v740
  %v742 = vpop.xlane.xlu0 %741
  %v743 = vsel %vm625, %v593, 0.0
  %744 = vadd.xlane.f32.xlu0 %v743
  %v745 = vpop.xlane.xlu0 %744
  %v746 = vsel %vm625, %v596, 0.0
  %747 = vadd.xlane.f32.xlu0 %v746
  %v748 = vpop.xlane.xlu0 %747
  %v749 = vsel %vm625, %v599, 0.0
  %750 = vadd.xlane.f32.xlu0 %v749
  %v751 = vpop.xlane.xlu0 %750
  %v752 = vsel %vm625, %v602, 0.0
  %753 = vadd.xlane.f32.xlu0 %v752
  %v754 = vpop.xlane.xlu0 %753
  %v755 = vsel %vm625, %v605, 0.0
  %756 = vadd.xlane.f32.xlu0 %v755
  %v757 = vpop.xlane.xlu0 %756
  %v758 = vsel %vm625, %v608, 0.0
  %759 = vadd.xlane.f32.xlu0 %v758
  %v760 = vpop.xlane.xlu0 %759
  %v761 = vsel %vm625, %v611, 0.0
  %762 = vadd.xlane.f32.xlu0 %v761
  %v763 = vpop.xlane.xlu0 %762
  %v764 = vsel %vm625, %v614, 0.0
  %765 = vadd.xlane.f32.xlu0 %v764
  %v766 = vpop.xlane.xlu0 %765
  %v767 = vsel %vm625, %v617, 0.0
  %768 = vadd.xlane.f32.xlu0 %v767
  %v769 = vpop.xlane.xlu0 %768
  %v770 = vsel %vm625, %v620, 0.0
  %771 = vadd.xlane.f32.xlu0 %v770
  %v772 = vpop.xlane.xlu0 %771
  %v773 = vsel %vm625, %v623, 0.0
  %774 = vadd.xlane.f32.xlu0 %v773
  %v775 = vpop.xlane.xlu0 %774
  %v776 = vmul.f32 %v628, 0.020408163
  %v777 = vmul.f32 %v631, 0.020408163
  %v778 = vmul.f32 %v634, 0.020408163
  %v779 = vmul.f32 %v637, 0.020408163
  %v780 = vmul.f32 %v640, 0.020408163
  %v781 = vmul.f32 %v643, 0.020408163
  %v782 = vmul.f32 %v646, 0.020408163
  %v783 = vmul.f32 %v649, 0.020408163
  %v784 = vmul.f32 %v652, 0.020408163
  %v785 = vmul.f32 %v655, 0.020408163
  %v786 = vmul.f32 %v658, 0.020408163
  %v787 = vmul.f32 %v661, 0.020408163
  %v788 = vmul.f32 %v664, 0.020408163
  %v789 = vmul.f32 %v667, 0.020408163
  %v790 = vmul.f32 %v670, 0.020408163
  %v791 = vmul.f32 %v673, 0.020408163
  %v792 = vmul.f32 %v676, 0.020408163
  %v793 = vmul.f32 %v679, 0.020408163
  %v794 = vmul.f32 %v682, 0.020408163
  %v795 = vmul.f32 %v685, 0.020408163
  %v796 = vmul.f32 %v688, 0.020408163
  %v797 = vmul.f32 %v691, 0.020408163
  %v798 = vmul.f32 %v694, 0.020408163
  %v799 = vmul.f32 %v697, 0.020408163
  %v800 = vmul.f32 %v700, 0.020408163
  %v801 = vmul.f32 %v703, 0.020408163
  %v802 = vmul.f32 %v706, 0.020408163
  %v803 = vmul.f32 %v709, 0.020408163
  %v804 = vmul.f32 %v712, 0.020408163
  %v805 = vmul.f32 %v715, 0.020408163
  %v806 = vmul.f32 %v718, 0.020408163
  %v807 = vmul.f32 %v721, 0.020408163
  %v808 = vmul.f32 %v724, 0.020408163
  %v809 = vmul.f32 %v727, 0.020408163
  %v810 = vmul.f32 %v730, 0.020408163
  %v811 = vmul.f32 %v733, 0.020408163
  %v812 = vmul.f32 %v736, 0.020408163
  %v813 = vmul.f32 %v739, 0.020408163
  %v814 = vmul.f32 %v742, 0.020408163
  %v815 = vmul.f32 %v745, 0.020408163
  %v816 = vmul.f32 %v748, 0.020408163
  %v817 = vmul.f32 %v751, 0.020408163
  %v818 = vmul.f32 %v754, 0.020408163
  %v819 = vmul.f32 %v757, 0.020408163
  %v820 = vmul.f32 %v760, 0.020408163
  %v821 = vmul.f32 %v763, 0.020408163
  %v822 = vmul.f32 %v766, 0.020408163
  %v823 = vmul.f32 %v769, 0.020408163
  %v824 = vmul.f32 %v772, 0.020408163
  %v825 = vmul.f32 %v775, 0.020408163
  %v826 = vsub.f32 %v476, %v776
  %v827 = vsub.f32 %v479, %v777
  %v828 = vsub.f32 %v482, %v778
  %v829 = vsub.f32 %v485, %v779
  %v830 = vsub.f32 %v488, %v780
  %v831 = vsub.f32 %v491, %v781
  %v832 = vsub.f32 %v494, %v782
  %v833 = vsub.f32 %v497, %v783
  %v834 = vsub.f32 %v500, %v784
  %v835 = vsub.f32 %v503, %v785
  %v836 = vsub.f32 %v506, %v786
  %v837 = vsub.f32 %v509, %v787
  %v838 = vsub.f32 %v512, %v788
  %v839 = vsub.f32 %v515, %v789
  %v840 = vsub.f32 %v518, %v790
  %v841 = vsub.f32 %v521, %v791
  %v842 = vsub.f32 %v524, %v792
  %v843 = vsub.f32 %v527, %v793
  %v844 = vsub.f32 %v530, %v794
  %v845 = vsub.f32 %v533, %v795
  %v846 = vsub.f32 %v536, %v796
  %v847 = vsub.f32 %v539, %v797
  %v848 = vsub.f32 %v542, %v798
  %v849 = vsub.f32 %v545, %v799
  %v850 = vsub.f32 %v548, %v800
  %v851 = vsub.f32 %v551, %v801
  %v852 = vsub.f32 %v554, %v802
  %v853 = vsub.f32 %v557, %v803
  %v854 = vsub.f32 %v560, %v804
  %v855 = vsub.f32 %v563, %v805
  %v856 = vsub.f32 %v566, %v806
  %v857 = vsub.f32 %v569, %v807
  %v858 = vsub.f32 %v572, %v808
  %v859 = vsub.f32 %v575, %v809
  %v860 = vsub.f32 %v578, %v810
  %v861 = vsub.f32 %v581, %v811
  %v862 = vsub.f32 %v584, %v812
  %v863 = vsub.f32 %v587, %v813
  %v864 = vsub.f32 %v590, %v814
  %v865 = vsub.f32 %v593, %v815
  %v866 = vsub.f32 %v596, %v816
  %v867 = vsub.f32 %v599, %v817
  %v868 = vsub.f32 %v602, %v818
  %v869 = vsub.f32 %v605, %v819
  %v870 = vsub.f32 %v608, %v820
  %v871 = vsub.f32 %v611, %v821
  %v872 = vsub.f32 %v614, %v822
  %v873 = vsub.f32 %v617, %v823
  %v874 = vsub.f32 %v620, %v824
  %v875 = vsub.f32 %v623, %v825
  %v876 = vmul.f32 %v826, %v826
  %v877 = vmul.f32 %v827, %v827
  %v878 = vmul.f32 %v828, %v828
  %v879 = vmul.f32 %v829, %v829
  %v880 = vmul.f32 %v830, %v830
  %v881 = vmul.f32 %v831, %v831
  %v882 = vmul.f32 %v832, %v832
  %v883 = vmul.f32 %v833, %v833
  %v884 = vmul.f32 %v834, %v834
  %v885 = vmul.f32 %v835, %v835
  %v886 = vmul.f32 %v836, %v836
  %v887 = vmul.f32 %v837, %v837
  %v888 = vmul.f32 %v838, %v838
  %v889 = vmul.f32 %v839, %v839
  %v890 = vmul.f32 %v840, %v840
  %v891 = vmul.f32 %v841, %v841
  %v892 = vmul.f32 %v842, %v842
  %v893 = vmul.f32 %v843, %v843
  %v894 = vmul.f32 %v844, %v844
  %v895 = vmul.f32 %v845, %v845
  %v896 = vmul.f32 %v846, %v846
  %v897 = vmul.f32 %v847, %v847
  %v898 = vmul.f32 %v848, %v848
  %v899 = vmul.f32 %v849, %v849
  %v900 = vmul.f32 %v850, %v850
  %v901 = vmul.f32 %v851, %v851
  %v902 = vmul.f32 %v852, %v852
  %v903 = vmul.f32 %v853, %v853
  %v904 = vmul.f32 %v854, %v854
  %v905 = vmul.f32 %v855, %v855
  %v906 = vmul.f32 %v856, %v856
  %v907 = vmul.f32 %v857, %v857
  %v908 = vmul.f32 %v858, %v858
  %v909 = vmul.f32 %v859, %v859
  %v910 = vmul.f32 %v860, %v860
  %v911 = vmul.f32 %v861, %v861
  %v912 = vmul.f32 %v862, %v862
  %v913 = vmul.f32 %v863, %v863
  %v914 = vmul.f32 %v864, %v864
  %v915 = vmul.f32 %v865, %v865
  %v916 = vmul.f32 %v866, %v866
  %v917 = vmul.f32 %v867, %v867
  %v918 = vmul.f32 %v868, %v868
  %v919 = vmul.f32 %v869, %v869
  %v920 = vmul.f32 %v870, %v870
  %v921 = vmul.f32 %v871, %v871
  %v922 = vmul.f32 %v872, %v872
  %v923 = vmul.f32 %v873, %v873
  %v924 = vmul.f32 %v874, %v874
  %v925 = vmul.f32 %v875, %v875
  %v926 = vsel %vm625, %v876, 0.0
  %927 = vadd.xlane.f32.xlu0 %v926
  %v928 = vpop.xlane.xlu0 %927
  %v929 = vsel %vm625, %v877, 0.0
  %930 = vadd.xlane.f32.xlu0 %v929
  %v931 = vpop.xlane.xlu0 %930
  %v932 = vsel %vm625, %v878, 0.0
  %933 = vadd.xlane.f32.xlu0 %v932
  %v934 = vpop.xlane.xlu0 %933
  %v935 = vsel %vm625, %v879, 0.0
  %936 = vadd.xlane.f32.xlu0 %v935
  %v937 = vpop.xlane.xlu0 %936
  %v938 = vsel %vm625, %v880, 0.0
  %939 = vadd.xlane.f32.xlu0 %v938
  %v940 = vpop.xlane.xlu0 %939
  %v941 = vsel %vm625, %v881, 0.0
  %942 = vadd.xlane.f32.xlu0 %v941
  %v943 = vpop.xlane.xlu0 %942
  %v944 = vsel %vm625, %v882, 0.0
  %945 = vadd.xlane.f32.xlu0 %v944
  %v946 = vpop.xlane.xlu0 %945
  %v947 = vsel %vm625, %v883, 0.0
  %948 = vadd.xlane.f32.xlu0 %v947
  %v949 = vpop.xlane.xlu0 %948
  %v950 = vsel %vm625, %v884, 0.0
  %951 = vadd.xlane.f32.xlu0 %v950
  %v952 = vpop.xlane.xlu0 %951
  %v953 = vsel %vm625, %v885, 0.0
  %954 = vadd.xlane.f32.xlu0 %v953
  %v955 = vpop.xlane.xlu0 %954
  %v956 = vsel %vm625, %v886, 0.0
  %957 = vadd.xlane.f32.xlu0 %v956
  %v958 = vpop.xlane.xlu0 %957
  %v959 = vsel %vm625, %v887, 0.0
  %960 = vadd.xlane.f32.xlu0 %v959
  %v961 = vpop.xlane.xlu0 %960
  %v962 = vsel %vm625, %v888, 0.0
  %963 = vadd.xlane.f32.xlu0 %v962
  %v964 = vpop.xlane.xlu0 %963
  %v965 = vsel %vm625, %v889, 0.0
  %966 = vadd.xlane.f32.xlu0 %v965
  %v967 = vpop.xlane.xlu0 %966
  %v968 = vsel %vm625, %v890, 0.0
  %969 = vadd.xlane.f32.xlu0 %v968
  %v970 = vpop.xlane.xlu0 %969
  %v971 = vsel %vm625, %v891, 0.0
  %972 = vadd.xlane.f32.xlu0 %v971
  %v973 = vpop.xlane.xlu0 %972
  %v974 = vsel %vm625, %v892, 0.0
  %975 = vadd.xlane.f32.xlu0 %v974
  %v976 = vpop.xlane.xlu0 %975
  %v977 = vsel %vm625, %v893, 0.0
  %978 = vadd.xlane.f32.xlu0 %v977
  %v979 = vpop.xlane.xlu0 %978
  %v980 = vsel %vm625, %v894, 0.0
  %981 = vadd.xlane.f32.xlu0 %v980
  %v982 = vpop.xlane.xlu0 %981
  %v983 = vsel %vm625, %v895, 0.0
  %984 = vadd.xlane.f32.xlu0 %v983
  %v985 = vpop.xlane.xlu0 %984
  %v986 = vsel %vm625, %v896, 0.0
  %987 = vadd.xlane.f32.xlu0 %v986
  %v988 = vpop.xlane.xlu0 %987
  %v989 = vsel %vm625, %v897, 0.0
  %990 = vadd.xlane.f32.xlu0 %v989
  %v991 = vpop.xlane.xlu0 %990
  %v992 = vsel %vm625, %v898, 0.0
  %993 = vadd.xlane.f32.xlu0 %v992
  %v994 = vpop.xlane.xlu0 %993
  %v995 = vsel %vm625, %v899, 0.0
  %996 = vadd.xlane.f32.xlu0 %v995
  %v997 = vpop.xlane.xlu0 %996
  %v998 = vsel %vm625, %v900, 0.0
  %999 = vadd.xlane.f32.xlu0 %v998
  %v1000 = vpop.xlane.xlu0 %999
  %v1001 = vsel %vm625, %v901, 0.0
  %1002 = vadd.xlane.f32.xlu0 %v1001
  %v1003 = vpop.xlane.xlu0 %1002
  %v1004 = vsel %vm625, %v902, 0.0
  %1005 = vadd.xlane.f32.xlu0 %v1004
  %v1006 = vpop.xlane.xlu0 %1005
  %v1007 = vsel %vm625, %v903, 0.0
  %1008 = vadd.xlane.f32.xlu0 %v1007
  %v1009 = vpop.xlane.xlu0 %1008
  %v1010 = vsel %vm625, %v904, 0.0
  %1011 = vadd.xlane.f32.xlu0 %v1010
  %v1012 = vpop.xlane.xlu0 %1011
  %v1013 = vsel %vm625, %v905, 0.0
  %1014 = vadd.xlane.f32.xlu0 %v1013
  %v1015 = vpop.xlane.xlu0 %1014
  %v1016 = vsel %vm625, %v906, 0.0
  %1017 = vadd.xlane.f32.xlu0 %v1016
  %v1018 = vpop.xlane.xlu0 %1017
  %v1019 = vsel %vm625, %v907, 0.0
  %1020 = vadd.xlane.f32.xlu0 %v1019
  %v1021 = vpop.xlane.xlu0 %1020
  %v1022 = vsel %vm625, %v908, 0.0
  %1023 = vadd.xlane.f32.xlu0 %v1022
  %v1024 = vpop.xlane.xlu0 %1023
  %v1025 = vsel %vm625, %v909, 0.0
  %1026 = vadd.xlane.f32.xlu0 %v1025
  %v1027 = vpop.xlane.xlu0 %1026
  %v1028 = vsel %vm625, %v910, 0.0
  %1029 = vadd.xlane.f32.xlu0 %v1028
  %v1030 = vpop.xlane.xlu0 %1029
  %v1031 = vsel %vm625, %v911, 0.0
  %1032 = vadd.xlane.f32.xlu0 %v1031
  %v1033 = vpop.xlane.xlu0 %1032
  %v1034 = vsel %vm625, %v912, 0.0
  %1035 = vadd.xlane.f32.xlu0 %v1034
  %v1036 = vpop.xlane.xlu0 %1035
  %v1037 = vsel %vm625, %v913, 0.0
  %1038 = vadd.xlane.f32.xlu0 %v1037
  %v1039 = vpop.xlane.xlu0 %1038
  %v1040 = vsel %vm625, %v914, 0.0
  %1041 = vadd.xlane.f32.xlu0 %v1040
  %v1042 = vpop.xlane.xlu0 %1041
  %v1043 = vsel %vm625, %v915, 0.0
  %1044 = vadd.xlane.f32.xlu0 %v1043
  %v1045 = vpop.xlane.xlu0 %1044
  %v1046 = vsel %vm625, %v916, 0.0
  %1047 = vadd.xlane.f32.xlu0 %v1046
  %v1048 = vpop.xlane.xlu0 %1047
  %v1049 = vsel %vm625, %v917, 0.0
  %1050 = vadd.xlane.f32.xlu0 %v1049
  %v1051 = vpop.xlane.xlu0 %1050
  %v1052 = vsel %vm625, %v918, 0.0
  %1053 = vadd.xlane.f32.xlu0 %v1052
  %v1054 = vpop.xlane.xlu0 %1053
  %v1055 = vsel %vm625, %v919, 0.0
  %1056 = vadd.xlane.f32.xlu0 %v1055
  %v1057 = vpop.xlane.xlu0 %1056
  %v1058 = vsel %vm625, %v920, 0.0
  %1059 = vadd.xlane.f32.xlu0 %v1058
  %v1060 = vpop.xlane.xlu0 %1059
  %v1061 = vsel %vm625, %v921, 0.0
  %1062 = vadd.xlane.f32.xlu0 %v1061
  %v1063 = vpop.xlane.xlu0 %1062
  %v1064 = vsel %vm625, %v922, 0.0
  %1065 = vadd.xlane.f32.xlu0 %v1064
  %v1066 = vpop.xlane.xlu0 %1065
  %v1067 = vsel %vm625, %v923, 0.0
  %1068 = vadd.xlane.f32.xlu0 %v1067
  %v1069 = vpop.xlane.xlu0 %1068
  %v1070 = vsel %vm625, %v924, 0.0
  %1071 = vadd.xlane.f32.xlu0 %v1070
  %v1072 = vpop.xlane.xlu0 %1071
  %v1073 = vsel %vm625, %v925, 0.0
  %1074 = vadd.xlane.f32.xlu0 %v1073
  %v1075 = vpop.xlane.xlu0 %1074
  %v1076 = vmul.f32 %v928, 0.020408163
  %v1077 = vmul.f32 %v931, 0.020408163
  %v1078 = vmul.f32 %v934, 0.020408163
  %v1079 = vmul.f32 %v937, 0.020408163
  %v1080 = vmul.f32 %v940, 0.020408163
  %v1081 = vmul.f32 %v943, 0.020408163
  %v1082 = vmul.f32 %v946, 0.020408163
  %v1083 = vmul.f32 %v949, 0.020408163
  %v1084 = vmul.f32 %v952, 0.020408163
  %v1085 = vmul.f32 %v955, 0.020408163
  %v1086 = vmul.f32 %v958, 0.020408163
  %v1087 = vmul.f32 %v961, 0.020408163
  %v1088 = vmul.f32 %v964, 0.020408163
  %v1089 = vmul.f32 %v967, 0.020408163
  %v1090 = vmul.f32 %v970, 0.020408163
  %v1091 = vmul.f32 %v973, 0.020408163
  %v1092 = vmul.f32 %v976, 0.020408163
  %v1093 = vmul.f32 %v979, 0.020408163
  %v1094 = vmul.f32 %v982, 0.020408163
  %v1095 = vmul.f32 %v985, 0.020408163
  %v1096 = vmul.f32 %v988, 0.020408163
  %v1097 = vmul.f32 %v991, 0.020408163
  %v1098 = vmul.f32 %v994, 0.020408163
  %v1099 = vmul.f32 %v997, 0.020408163
  %v1100 = vmul.f32 %v1000, 0.020408163
  %v1101 = vmul.f32 %v1003, 0.020408163
  %v1102 = vmul.f32 %v1006, 0.020408163
  %v1103 = vmul.f32 %v1009, 0.020408163
  %v1104 = vmul.f32 %v1012, 0.020408163
  %v1105 = vmul.f32 %v1015, 0.020408163
  %v1106 = vmul.f32 %v1018, 0.020408163
  %v1107 = vmul.f32 %v1021, 0.020408163
  %v1108 = vmul.f32 %v1024, 0.020408163
  %v1109 = vmul.f32 %v1027, 0.020408163
  %v1110 = vmul.f32 %v1030, 0.020408163
  %v1111 = vmul.f32 %v1033, 0.020408163
  %v1112 = vmul.f32 %v1036, 0.020408163
  %v1113 = vmul.f32 %v1039, 0.020408163
  %v1114 = vmul.f32 %v1042, 0.020408163
  %v1115 = vmul.f32 %v1045, 0.020408163
  %v1116 = vmul.f32 %v1048, 0.020408163
  %v1117 = vmul.f32 %v1051, 0.020408163
  %v1118 = vmul.f32 %v1054, 0.020408163
  %v1119 = vmul.f32 %v1057, 0.020408163
  %v1120 = vmul.f32 %v1060, 0.020408163
  %v1121 = vmul.f32 %v1063, 0.020408163
  %v1122 = vmul.f32 %v1066, 0.020408163
  %v1123 = vmul.f32 %v1069, 0.020408163
  %v1124 = vmul.f32 %v1072, 0.020408163
  %v1125 = vmul.f32 %v1075, 0.020408163
  %v1126 = vadd.f32 %v1076, 1e-05
  %v1127 = vadd.f32 %v1077, 1e-05
  %v1128 = vadd.f32 %v1078, 1e-05
  %v1129 = vadd.f32 %v1079, 1e-05
  %v1130 = vadd.f32 %v1080, 1e-05
  %v1131 = vadd.f32 %v1081, 1e-05
  %v1132 = vadd.f32 %v1082, 1e-05
  %v1133 = vadd.f32 %v1083, 1e-05
  %v1134 = vadd.f32 %v1084, 1e-05
  %v1135 = vadd.f32 %v1085, 1e-05
  %v1136 = vadd.f32 %v1086, 1e-05
  %v1137 = vadd.f32 %v1087, 1e-05
  %v1138 = vadd.f32 %v1088, 1e-05
  %v1139 = vadd.f32 %v1089, 1e-05
  %v1140 = vadd.f32 %v1090, 1e-05
  %v1141 = vadd.f32 %v1091, 1e-05
  %v1142 = vadd.f32 %v1092, 1e-05
  %v1143 = vadd.f32 %v1093, 1e-05
  %v1144 = vadd.f32 %v1094, 1e-05
  %v1145 = vadd.f32 %v1095, 1e-05
  %v1146 = vadd.f32 %v1096, 1e-05
  %v1147 = vadd.f32 %v1097, 1e-05
  %v1148 = vadd.f32 %v1098, 1e-05
  %v1149 = vadd.f32 %v1099, 1e-05
  %v1150 = vadd.f32 %v1100, 1e-05
  %v1151 = vadd.f32 %v1101, 1e-05
  %v1152 = vadd.f32 %v1102, 1e-05
  %v1153 = vadd.f32 %v1103, 1e-05
  %v1154 = vadd.f32 %v1104, 1e-05
  %v1155 = vadd.f32 %v1105, 1e-05
  %v1156 = vadd.f32 %v1106, 1e-05
  %v1157 = vadd.f32 %v1107, 1e-05
  %v1158 = vadd.f32 %v1108, 1e-05
  %v1159 = vadd.f32 %v1109, 1e-05
  %v1160 = vadd.f32 %v1110, 1e-05
  %v1161 = vadd.f32 %v1111, 1e-05
  %v1162 = vadd.f32 %v1112, 1e-05
  %v1163 = vadd.f32 %v1113, 1e-05
  %v1164 = vadd.f32 %v1114, 1e-05
  %v1165 = vadd.f32 %v1115, 1e-05
  %v1166 = vadd.f32 %v1116, 1e-05
  %v1167 = vadd.f32 %v1117, 1e-05
  %v1168 = vadd.f32 %v1118, 1e-05
  %v1169 = vadd.f32 %v1119, 1e-05
  %v1170 = vadd.f32 %v1120, 1e-05
  %v1171 = vadd.f32 %v1121, 1e-05
  %v1172 = vadd.f32 %v1122, 1e-05
  %v1173 = vadd.f32 %v1123, 1e-05
  %v1174 = vadd.f32 %v1124, 1e-05
  %v1175 = vadd.f32 %v1125, 1e-05
  %v1176 = vrsqrt.pop %v1126
  %v1177 = vmul.f32 %v1176, %v1126
  %v1178 = vmul.f32 %v1177, %v1176
  %v1179 = vmul.f32 0.5, %v1178
  %v1180 = vsub.f32 1.5, %v1179
  %v1181 = vmul.f32 %v1176, %v1180
  %vm1182 = vweird.f32 %v1126
  %vm1183 = vweird.f32 %v1176
  %vm1184 = vmor %vm1182, %vm1183
  %v1185 = vsel %vm1184, %v1176, %v1181
  %v1186 = vrsqrt.pop %v1127
  %v1187 = vmul.f32 %v1186, %v1127
  %v1188 = vmul.f32 %v1187, %v1186
  %v1189 = vmul.f32 0.5, %v1188
  %v1190 = vsub.f32 1.5, %v1189
  %v1191 = vmul.f32 %v1186, %v1190
  %vm1192 = vweird.f32 %v1127
  %vm1193 = vweird.f32 %v1186
  %vm1194 = vmor %vm1192, %vm1193
  %v1195 = vsel %vm1194, %v1186, %v1191
  %v1196 = vrsqrt.pop %v1128
  %v1197 = vmul.f32 %v1196, %v1128
  %v1198 = vmul.f32 %v1197, %v1196
  %v1199 = vmul.f32 0.5, %v1198
  %v1200 = vsub.f32 1.5, %v1199
  %v1201 = vmul.f32 %v1196, %v1200
  %vm1202 = vweird.f32 %v1128
  %vm1203 = vweird.f32 %v1196
  %vm1204 = vmor %vm1202, %vm1203
  %v1205 = vsel %vm1204, %v1196, %v1201
  %v1206 = vrsqrt.pop %v1129
  %v1207 = vmul.f32 %v1206, %v1129
  %v1208 = vmul.f32 %v1207, %v1206
  %v1209 = vmul.f32 0.5, %v1208
  %v1210 = vsub.f32 1.5, %v1209
  %v1211 = vmul.f32 %v1206, %v1210
  %vm1212 = vweird.f32 %v1129
  %vm1213 = vweird.f32 %v1206
  %vm1214 = vmor %vm1212, %vm1213
  %v1215 = vsel %vm1214, %v1206, %v1211
  %v1216 = vrsqrt.pop %v1130
  %v1217 = vmul.f32 %v1216, %v1130
  %v1218 = vmul.f32 %v1217, %v1216
  %v1219 = vmul.f32 0.5, %v1218
  %v1220 = vsub.f32 1.5, %v1219
  %v1221 = vmul.f32 %v1216, %v1220
  %vm1222 = vweird.f32 %v1130
  %vm1223 = vweird.f32 %v1216
  %vm1224 = vmor %vm1222, %vm1223
  %v1225 = vsel %vm1224, %v1216, %v1221
  %v1226 = vrsqrt.pop %v1131
  %v1227 = vmul.f32 %v1226, %v1131
  %v1228 = vmul.f32 %v1227, %v1226
  %v1229 = vmul.f32 0.5, %v1228
  %v1230 = vsub.f32 1.5, %v1229
  %v1231 = vmul.f32 %v1226, %v1230
  %vm1232 = vweird.f32 %v1131
  %vm1233 = vweird.f32 %v1226
  %vm1234 = vmor %vm1232, %vm1233
  %v1235 = vsel %vm1234, %v1226, %v1231
  %v1236 = vrsqrt.pop %v1132
  %v1237 = vmul.f32 %v1236, %v1132
  %v1238 = vmul.f32 %v1237, %v1236
  %v1239 = vmul.f32 0.5, %v1238
  %v1240 = vsub.f32 1.5, %v1239
  %v1241 = vmul.f32 %v1236, %v1240
  %vm1242 = vweird.f32 %v1132
  %vm1243 = vweird.f32 %v1236
  %vm1244 = vmor %vm1242, %vm1243
  %v1245 = vsel %vm1244, %v1236, %v1241
  %v1246 = vrsqrt.pop %v1133
  %v1247 = vmul.f32 %v1246, %v1133
  %v1248 = vmul.f32 %v1247, %v1246
  %v1249 = vmul.f32 0.5, %v1248
  %v1250 = vsub.f32 1.5, %v1249
  %v1251 = vmul.f32 %v1246, %v1250
  %vm1252 = vweird.f32 %v1133
  %vm1253 = vweird.f32 %v1246
  %vm1254 = vmor %vm1252, %vm1253
  %v1255 = vsel %vm1254, %v1246, %v1251
  %v1256 = vrsqrt.pop %v1134
  %v1257 = vmul.f32 %v1256, %v1134
  %v1258 = vmul.f32 %v1257, %v1256
  %v1259 = vmul.f32 0.5, %v1258
  %v1260 = vsub.f32 1.5, %v1259
  %v1261 = vmul.f32 %v1256, %v1260
  %vm1262 = vweird.f32 %v1134
  %vm1263 = vweird.f32 %v1256
  %vm1264 = vmor %vm1262, %vm1263
  %v1265 = vsel %vm1264, %v1256, %v1261
  %v1266 = vrsqrt.pop %v1135
  %v1267 = vmul.f32 %v1266, %v1135
  %v1268 = vmul.f32 %v1267, %v1266
  %v1269 = vmul.f32 0.5, %v1268
  %v1270 = vsub.f32 1.5, %v1269
  %v1271 = vmul.f32 %v1266, %v1270
  %vm1272 = vweird.f32 %v1135
  %vm1273 = vweird.f32 %v1266
  %vm1274 = vmor %vm1272, %vm1273
  %v1275 = vsel %vm1274, %v1266, %v1271
  %v1276 = vrsqrt.pop %v1136
  %v1277 = vmul.f32 %v1276, %v1136
  %v1278 = vmul.f32 %v1277, %v1276
  %v1279 = vmul.f32 0.5, %v1278
  %v1280 = vsub.f32 1.5, %v1279
  %v1281 = vmul.f32 %v1276, %v1280
  %vm1282 = vweird.f32 %v1136
  %vm1283 = vweird.f32 %v1276
  %vm1284 = vmor %vm1282, %vm1283
  %v1285 = vsel %vm1284, %v1276, %v1281
  %v1286 = vrsqrt.pop %v1137
  %v1287 = vmul.f32 %v1286, %v1137
  %v1288 = vmul.f32 %v1287, %v1286
  %v1289 = vmul.f32 0.5, %v1288
  %v1290 = vsub.f32 1.5, %v1289
  %v1291 = vmul.f32 %v1286, %v1290
  %vm1292 = vweird.f32 %v1137
  %vm1293 = vweird.f32 %v1286
  %vm1294 = vmor %vm1292, %vm1293
  %v1295 = vsel %vm1294, %v1286, %v1291
  %v1296 = vrsqrt.pop %v1138
  %v1297 = vmul.f32 %v1296, %v1138
  %v1298 = vmul.f32 %v1297, %v1296
  %v1299 = vmul.f32 0.5, %v1298
  %v1300 = vsub.f32 1.5, %v1299
  %v1301 = vmul.f32 %v1296, %v1300
  %vm1302 = vweird.f32 %v1138
  %vm1303 = vweird.f32 %v1296
  %vm1304 = vmor %vm1302, %vm1303
  %v1305 = vsel %vm1304, %v1296, %v1301
  %v1306 = vrsqrt.pop %v1139
  %v1307 = vmul.f32 %v1306, %v1139
  %v1308 = vmul.f32 %v1307, %v1306
  %v1309 = vmul.f32 0.5, %v1308
  %v1310 = vsub.f32 1.5, %v1309
  %v1311 = vmul.f32 %v1306, %v1310
  %vm1312 = vweird.f32 %v1139
  %vm1313 = vweird.f32 %v1306
  %vm1314 = vmor %vm1312, %vm1313
  %v1315 = vsel %vm1314, %v1306, %v1311
  %v1316 = vrsqrt.pop %v1140
  %v1317 = vmul.f32 %v1316, %v1140
  %v1318 = vmul.f32 %v1317, %v1316
  %v1319 = vmul.f32 0.5, %v1318
  %v1320 = vsub.f32 1.5, %v1319
  %v1321 = vmul.f32 %v1316, %v1320
  %vm1322 = vweird.f32 %v1140
  %vm1323 = vweird.f32 %v1316
  %vm1324 = vmor %vm1322, %vm1323
  %v1325 = vsel %vm1324, %v1316, %v1321
  %v1326 = vrsqrt.pop %v1141
  %v1327 = vmul.f32 %v1326, %v1141
  %v1328 = vmul.f32 %v1327, %v1326
  %v1329 = vmul.f32 0.5, %v1328
  %v1330 = vsub.f32 1.5, %v1329
  %v1331 = vmul.f32 %v1326, %v1330
  %vm1332 = vweird.f32 %v1141
  %vm1333 = vweird.f32 %v1326
  %vm1334 = vmor %vm1332, %vm1333
  %v1335 = vsel %vm1334, %v1326, %v1331
  %v1336 = vrsqrt.pop %v1142
  %v1337 = vmul.f32 %v1336, %v1142
  %v1338 = vmul.f32 %v1337, %v1336
  %v1339 = vmul.f32 0.5, %v1338
  %v1340 = vsub.f32 1.5, %v1339
  %v1341 = vmul.f32 %v1336, %v1340
  %vm1342 = vweird.f32 %v1142
  %vm1343 = vweird.f32 %v1336
  %vm1344 = vmor %vm1342, %vm1343
  %v1345 = vsel %vm1344, %v1336, %v1341
  %v1346 = vrsqrt.pop %v1143
  %v1347 = vmul.f32 %v1346, %v1143
  %v1348 = vmul.f32 %v1347, %v1346
  %v1349 = vmul.f32 0.5, %v1348
  %v1350 = vsub.f32 1.5, %v1349
  %v1351 = vmul.f32 %v1346, %v1350
  %vm1352 = vweird.f32 %v1143
  %vm1353 = vweird.f32 %v1346
  %vm1354 = vmor %vm1352, %vm1353
  %v1355 = vsel %vm1354, %v1346, %v1351
  %v1356 = vrsqrt.pop %v1144
  %v1357 = vmul.f32 %v1356, %v1144
  %v1358 = vmul.f32 %v1357, %v1356
  %v1359 = vmul.f32 0.5, %v1358
  %v1360 = vsub.f32 1.5, %v1359
  %v1361 = vmul.f32 %v1356, %v1360
  %vm1362 = vweird.f32 %v1144
  %vm1363 = vweird.f32 %v1356
  %vm1364 = vmor %vm1362, %vm1363
  %v1365 = vsel %vm1364, %v1356, %v1361
  %v1366 = vrsqrt.pop %v1145
  %v1367 = vmul.f32 %v1366, %v1145
  %v1368 = vmul.f32 %v1367, %v1366
  %v1369 = vmul.f32 0.5, %v1368
  %v1370 = vsub.f32 1.5, %v1369
  %v1371 = vmul.f32 %v1366, %v1370
  %vm1372 = vweird.f32 %v1145
  %vm1373 = vweird.f32 %v1366
  %vm1374 = vmor %vm1372, %vm1373
  %v1375 = vsel %vm1374, %v1366, %v1371
  %v1376 = vrsqrt.pop %v1146
  %v1377 = vmul.f32 %v1376, %v1146
  %v1378 = vmul.f32 %v1377, %v1376
  %v1379 = vmul.f32 0.5, %v1378
  %v1380 = vsub.f32 1.5, %v1379
  %v1381 = vmul.f32 %v1376, %v1380
  %vm1382 = vweird.f32 %v1146
  %vm1383 = vweird.f32 %v1376
  %vm1384 = vmor %vm1382, %vm1383
  %v1385 = vsel %vm1384, %v1376, %v1381
  %v1386 = vrsqrt.pop %v1147
  %v1387 = vmul.f32 %v1386, %v1147
  %v1388 = vmul.f32 %v1387, %v1386
  %v1389 = vmul.f32 0.5, %v1388
  %v1390 = vsub.f32 1.5, %v1389
  %v1391 = vmul.f32 %v1386, %v1390
  %vm1392 = vweird.f32 %v1147
  %vm1393 = vweird.f32 %v1386
  %vm1394 = vmor %vm1392, %vm1393
  %v1395 = vsel %vm1394, %v1386, %v1391
  %v1396 = vrsqrt.pop %v1148
  %v1397 = vmul.f32 %v1396, %v1148
  %v1398 = vmul.f32 %v1397, %v1396
  %v1399 = vmul.f32 0.5, %v1398
  %v1400 = vsub.f32 1.5, %v1399
  %v1401 = vmul.f32 %v1396, %v1400
  %vm1402 = vweird.f32 %v1148
  %vm1403 = vweird.f32 %v1396
  %vm1404 = vmor %vm1402, %vm1403
  %v1405 = vsel %vm1404, %v1396, %v1401
  %v1406 = vrsqrt.pop %v1149
  %v1407 = vmul.f32 %v1406, %v1149
  %v1408 = vmul.f32 %v1407, %v1406
  %v1409 = vmul.f32 0.5, %v1408
  %v1410 = vsub.f32 1.5, %v1409
  %v1411 = vmul.f32 %v1406, %v1410
  %vm1412 = vweird.f32 %v1149
  %vm1413 = vweird.f32 %v1406
  %vm1414 = vmor %vm1412, %vm1413
  %v1415 = vsel %vm1414, %v1406, %v1411
  %v1416 = vrsqrt.pop %v1150
  %v1417 = vmul.f32 %v1416, %v1150
  %v1418 = vmul.f32 %v1417, %v1416
  %v1419 = vmul.f32 0.5, %v1418
  %v1420 = vsub.f32 1.5, %v1419
  %v1421 = vmul.f32 %v1416, %v1420
  %vm1422 = vweird.f32 %v1150
  %vm1423 = vweird.f32 %v1416
  %vm1424 = vmor %vm1422, %vm1423
  %v1425 = vsel %vm1424, %v1416, %v1421
  %v1426 = vrsqrt.pop %v1151
  %v1427 = vmul.f32 %v1426, %v1151
  %v1428 = vmul.f32 %v1427, %v1426
  %v1429 = vmul.f32 0.5, %v1428
  %v1430 = vsub.f32 1.5, %v1429
  %v1431 = vmul.f32 %v1426, %v1430
  %vm1432 = vweird.f32 %v1151
  %vm1433 = vweird.f32 %v1426
  %vm1434 = vmor %vm1432, %vm1433
  %v1435 = vsel %vm1434, %v1426, %v1431
  %v1436 = vrsqrt.pop %v1152
  %v1437 = vmul.f32 %v1436, %v1152
  %v1438 = vmul.f32 %v1437, %v1436
  %v1439 = vmul.f32 0.5, %v1438
  %v1440 = vsub.f32 1.5, %v1439
  %v1441 = vmul.f32 %v1436, %v1440
  %vm1442 = vweird.f32 %v1152
  %vm1443 = vweird.f32 %v1436
  %vm1444 = vmor %vm1442, %vm1443
  %v1445 = vsel %vm1444, %v1436, %v1441
  %v1446 = vrsqrt.pop %v1153
  %v1447 = vmul.f32 %v1446, %v1153
  %v1448 = vmul.f32 %v1447, %v1446
  %v1449 = vmul.f32 0.5, %v1448
  %v1450 = vsub.f32 1.5, %v1449
  %v1451 = vmul.f32 %v1446, %v1450
  %vm1452 = vweird.f32 %v1153
  %vm1453 = vweird.f32 %v1446
  %vm1454 = vmor %vm1452, %vm1453
  %v1455 = vsel %vm1454, %v1446, %v1451
  %v1456 = vrsqrt.pop %v1154
  %v1457 = vmul.f32 %v1456, %v1154
  %v1458 = vmul.f32 %v1457, %v1456
  %v1459 = vmul.f32 0.5, %v1458
  %v1460 = vsub.f32 1.5, %v1459
  %v1461 = vmul.f32 %v1456, %v1460
  %vm1462 = vweird.f32 %v1154
  %vm1463 = vweird.f32 %v1456
  %vm1464 = vmor %vm1462, %vm1463
  %v1465 = vsel %vm1464, %v1456, %v1461
  %v1466 = vrsqrt.pop %v1155
  %v1467 = vmul.f32 %v1466, %v1155
  %v1468 = vmul.f32 %v1467, %v1466
  %v1469 = vmul.f32 0.5, %v1468
  %v1470 = vsub.f32 1.5, %v1469
  %v1471 = vmul.f32 %v1466, %v1470
  %vm1472 = vweird.f32 %v1155
  %vm1473 = vweird.f32 %v1466
  %vm1474 = vmor %vm1472, %vm1473
  %v1475 = vsel %vm1474, %v1466, %v1471
  %v1476 = vrsqrt.pop %v1156
  %v1477 = vmul.f32 %v1476, %v1156
  %v1478 = vmul.f32 %v1477, %v1476
  %v1479 = vmul.f32 0.5, %v1478
  %v1480 = vsub.f32 1.5, %v1479
  %v1481 = vmul.f32 %v1476, %v1480
  %vm1482 = vweird.f32 %v1156
  %vm1483 = vweird.f32 %v1476
  %vm1484 = vmor %vm1482, %vm1483
  %v1485 = vsel %vm1484, %v1476, %v1481
  %v1486 = vrsqrt.pop %v1157
  %v1487 = vmul.f32 %v1486, %v1157
  %v1488 = vmul.f32 %v1487, %v1486
  %v1489 = vmul.f32 0.5, %v1488
  %v1490 = vsub.f32 1.5, %v1489
  %v1491 = vmul.f32 %v1486, %v1490
  %vm1492 = vweird.f32 %v1157
  %vm1493 = vweird.f32 %v1486
  %vm1494 = vmor %vm1492, %vm1493
  %v1495 = vsel %vm1494, %v1486, %v1491
  %v1496 = vrsqrt.pop %v1158
  %v1497 = vmul.f32 %v1496, %v1158
  %v1498 = vmul.f32 %v1497, %v1496
  %v1499 = vmul.f32 0.5, %v1498
  %v1500 = vsub.f32 1.5, %v1499
  %v1501 = vmul.f32 %v1496, %v1500
  %vm1502 = vweird.f32 %v1158
  %vm1503 = vweird.f32 %v1496
  %vm1504 = vmor %vm1502, %vm1503
  %v1505 = vsel %vm1504, %v1496, %v1501
  %v1506 = vrsqrt.pop %v1159
  %v1507 = vmul.f32 %v1506, %v1159
  %v1508 = vmul.f32 %v1507, %v1506
  %v1509 = vmul.f32 0.5, %v1508
  %v1510 = vsub.f32 1.5, %v1509
  %v1511 = vmul.f32 %v1506, %v1510
  %vm1512 = vweird.f32 %v1159
  %vm1513 = vweird.f32 %v1506
  %vm1514 = vmor %vm1512, %vm1513
  %v1515 = vsel %vm1514, %v1506, %v1511
  %v1516 = vrsqrt.pop %v1160
  %v1517 = vmul.f32 %v1516, %v1160
  %v1518 = vmul.f32 %v1517, %v1516
  %v1519 = vmul.f32 0.5, %v1518
  %v1520 = vsub.f32 1.5, %v1519
  %v1521 = vmul.f32 %v1516, %v1520
  %vm1522 = vweird.f32 %v1160
  %vm1523 = vweird.f32 %v1516
  %vm1524 = vmor %vm1522, %vm1523
  %v1525 = vsel %vm1524, %v1516, %v1521
  %v1526 = vrsqrt.pop %v1161
  %v1527 = vmul.f32 %v1526, %v1161
  %v1528 = vmul.f32 %v1527, %v1526
  %v1529 = vmul.f32 0.5, %v1528
  %v1530 = vsub.f32 1.5, %v1529
  %v1531 = vmul.f32 %v1526, %v1530
  %vm1532 = vweird.f32 %v1161
  %vm1533 = vweird.f32 %v1526
  %vm1534 = vmor %vm1532, %vm1533
  %v1535 = vsel %vm1534, %v1526, %v1531
  %v1536 = vrsqrt.pop %v1162
  %v1537 = vmul.f32 %v1536, %v1162
  %v1538 = vmul.f32 %v1537, %v1536
  %v1539 = vmul.f32 0.5, %v1538
  %v1540 = vsub.f32 1.5, %v1539
  %v1541 = vmul.f32 %v1536, %v1540
  %vm1542 = vweird.f32 %v1162
  %vm1543 = vweird.f32 %v1536
  %vm1544 = vmor %vm1542, %vm1543
  %v1545 = vsel %vm1544, %v1536, %v1541
  %v1546 = vrsqrt.pop %v1163
  %v1547 = vmul.f32 %v1546, %v1163
  %v1548 = vmul.f32 %v1547, %v1546
  %v1549 = vmul.f32 0.5, %v1548
  %v1550 = vsub.f32 1.5, %v1549
  %v1551 = vmul.f32 %v1546, %v1550
  %vm1552 = vweird.f32 %v1163
  %vm1553 = vweird.f32 %v1546
  %vm1554 = vmor %vm1552, %vm1553
  %v1555 = vsel %vm1554, %v1546, %v1551
  %v1556 = vrsqrt.pop %v1164
  %v1557 = vmul.f32 %v1556, %v1164
  %v1558 = vmul.f32 %v1557, %v1556
  %v1559 = vmul.f32 0.5, %v1558
  %v1560 = vsub.f32 1.5, %v1559
  %v1561 = vmul.f32 %v1556, %v1560
  %vm1562 = vweird.f32 %v1164
  %vm1563 = vweird.f32 %v1556
  %vm1564 = vmor %vm1562, %vm1563
  %v1565 = vsel %vm1564, %v1556, %v1561
  %v1566 = vrsqrt.pop %v1165
  %v1567 = vmul.f32 %v1566, %v1165
  %v1568 = vmul.f32 %v1567, %v1566
  %v1569 = vmul.f32 0.5, %v1568
  %v1570 = vsub.f32 1.5, %v1569
  %v1571 = vmul.f32 %v1566, %v1570
  %vm1572 = vweird.f32 %v1165
  %vm1573 = vweird.f32 %v1566
  %vm1574 = vmor %vm1572, %vm1573
  %v1575 = vsel %vm1574, %v1566, %v1571
  %v1576 = vrsqrt.pop %v1166
  %v1577 = vmul.f32 %v1576, %v1166
  %v1578 = vmul.f32 %v1577, %v1576
  %v1579 = vmul.f32 0.5, %v1578
  %v1580 = vsub.f32 1.5, %v1579
  %v1581 = vmul.f32 %v1576, %v1580
  %vm1582 = vweird.f32 %v1166
  %vm1583 = vweird.f32 %v1576
  %vm1584 = vmor %vm1582, %vm1583
  %v1585 = vsel %vm1584, %v1576, %v1581
  %v1586 = vrsqrt.pop %v1167
  %v1587 = vmul.f32 %v1586, %v1167
  %v1588 = vmul.f32 %v1587, %v1586
  %v1589 = vmul.f32 0.5, %v1588
  %v1590 = vsub.f32 1.5, %v1589
  %v1591 = vmul.f32 %v1586, %v1590
  %vm1592 = vweird.f32 %v1167
  %vm1593 = vweird.f32 %v1586
  %vm1594 = vmor %vm1592, %vm1593
  %v1595 = vsel %vm1594, %v1586, %v1591
  %v1596 = vrsqrt.pop %v1168
  %v1597 = vmul.f32 %v1596, %v1168
  %v1598 = vmul.f32 %v1597, %v1596
  %v1599 = vmul.f32 0.5, %v1598
  %v1600 = vsub.f32 1.5, %v1599
  %v1601 = vmul.f32 %v1596, %v1600
  %vm1602 = vweird.f32 %v1168
  %vm1603 = vweird.f32 %v1596
  %vm1604 = vmor %vm1602, %vm1603
  %v1605 = vsel %vm1604, %v1596, %v1601
  %v1606 = vrsqrt.pop %v1169
  %v1607 = vmul.f32 %v1606, %v1169
  %v1608 = vmul.f32 %v1607, %v1606
  %v1609 = vmul.f32 0.5, %v1608
  %v1610 = vsub.f32 1.5, %v1609
  %v1611 = vmul.f32 %v1606, %v1610
  %vm1612 = vweird.f32 %v1169
  %vm1613 = vweird.f32 %v1606
  %vm1614 = vmor %vm1612, %vm1613
  %v1615 = vsel %vm1614, %v1606, %v1611
  %v1616 = vrsqrt.pop %v1170
  %v1617 = vmul.f32 %v1616, %v1170
  %v1618 = vmul.f32 %v1617, %v1616
  %v1619 = vmul.f32 0.5, %v1618
  %v1620 = vsub.f32 1.5, %v1619
  %v1621 = vmul.f32 %v1616, %v1620
  %vm1622 = vweird.f32 %v1170
  %vm1623 = vweird.f32 %v1616
  %vm1624 = vmor %vm1622, %vm1623
  %v1625 = vsel %vm1624, %v1616, %v1621
  %v1626 = vrsqrt.pop %v1171
  %v1627 = vmul.f32 %v1626, %v1171
  %v1628 = vmul.f32 %v1627, %v1626
  %v1629 = vmul.f32 0.5, %v1628
  %v1630 = vsub.f32 1.5, %v1629
  %v1631 = vmul.f32 %v1626, %v1630
  %vm1632 = vweird.f32 %v1171
  %vm1633 = vweird.f32 %v1626
  %vm1634 = vmor %vm1632, %vm1633
  %v1635 = vsel %vm1634, %v1626, %v1631
  %v1636 = vrsqrt.pop %v1172
  %v1637 = vmul.f32 %v1636, %v1172
  %v1638 = vmul.f32 %v1637, %v1636
  %v1639 = vmul.f32 0.5, %v1638
  %v1640 = vsub.f32 1.5, %v1639
  %v1641 = vmul.f32 %v1636, %v1640
  %vm1642 = vweird.f32 %v1172
  %vm1643 = vweird.f32 %v1636
  %vm1644 = vmor %vm1642, %vm1643
  %v1645 = vsel %vm1644, %v1636, %v1641
  %v1646 = vrsqrt.pop %v1173
  %v1647 = vmul.f32 %v1646, %v1173
  %v1648 = vmul.f32 %v1647, %v1646
  %v1649 = vmul.f32 0.5, %v1648
  %v1650 = vsub.f32 1.5, %v1649
  %v1651 = vmul.f32 %v1646, %v1650
  %vm1652 = vweird.f32 %v1173
  %vm1653 = vweird.f32 %v1646
  %vm1654 = vmor %vm1652, %vm1653
  %v1655 = vsel %vm1654, %v1646, %v1651
  %v1656 = vrsqrt.pop %v1174
  %v1657 = vmul.f32 %v1656, %v1174
  %v1658 = vmul.f32 %v1657, %v1656
  %v1659 = vmul.f32 0.5, %v1658
  %v1660 = vsub.f32 1.5, %v1659
  %v1661 = vmul.f32 %v1656, %v1660
  %vm1662 = vweird.f32 %v1174
  %vm1663 = vweird.f32 %v1656
  %vm1664 = vmor %vm1662, %vm1663
  %v1665 = vsel %vm1664, %v1656, %v1661
  %v1666 = vrsqrt.pop %v1175
  %v1667 = vmul.f32 %v1666, %v1175
  %v1668 = vmul.f32 %v1667, %v1666
  %v1669 = vmul.f32 0.5, %v1668
  %v1670 = vsub.f32 1.5, %v1669
  %v1671 = vmul.f32 %v1666, %v1670
  %vm1672 = vweird.f32 %v1175
  %vm1673 = vweird.f32 %v1666
  %vm1674 = vmor %vm1672, %vm1673
  %v1675 = vsel %vm1674, %v1666, %v1671
  %v1676 = vld [vmem:[%s3] sm:$0xff]
  %v1677 = vld [vmem:[%s3 + $0x8] sm:$0xff]
  %v1678 = vld [vmem:[%s3 + $0x10] sm:$0xff]
  %v1679 = vld [vmem:[%s3 + $0x18] sm:$0xff]
  %v1680 = vld [vmem:[%s3 + $0x20] sm:$0xff]
  %v1681 = vld [vmem:[%s3 + $0x28] sm:$0xff]
  %v1682 = vld [vmem:[%s3 + $0x30] sm:$0xff]
  %v1683 = vld [vmem:[%s3 + $0x38] sm:$0xff]
  %v1684 = vld [vmem:[%s3 + $0x40] sm:$0xff]
  %v1685 = vld [vmem:[%s3 + $0x48] sm:$0xff]
  %v1686 = vld [vmem:[%s3 + $0x50] sm:$0xff]
  %v1687 = vld [vmem:[%s3 + $0x58] sm:$0xff]
  %v1688 = vld [vmem:[%s3 + $0x60] sm:$0xff]
  %v1689 = vld [vmem:[%s3 + $0x68] sm:$0xff]
  %v1690 = vld [vmem:[%s3 + $0x70] sm:$0xff]
  %v1691 = vld [vmem:[%s3 + $0x78] sm:$0xff]
  %v1692 = vld [vmem:[%s3 + $0x80] sm:$0xff]
  %v1693 = vld [vmem:[%s3 + $0x88] sm:$0xff]
  %v1694 = vld [vmem:[%s3 + $0x90] sm:$0xff]
  %v1695 = vld [vmem:[%s3 + $0x98] sm:$0xff]
  %v1696 = vld [vmem:[%s3 + $0xa0] sm:$0xff]
  %v1697 = vld [vmem:[%s3 + $0xa8] sm:$0xff]
  %v1698 = vld [vmem:[%s3 + $0xb0] sm:$0xff]
  %v1699 = vld [vmem:[%s3 + $0xb8] sm:$0xff]
  %v1700 = vld [vmem:[%s3 + $0xc0] sm:$0xff]
  %v1701 = vld [vmem:[%s3 + $0xc8] sm:$0xff]
  %v1702 = vld [vmem:[%s3 + $0xd0] sm:$0xff]
  %v1703 = vld [vmem:[%s3 + $0xd8] sm:$0xff]
  %v1704 = vld [vmem:[%s3 + $0xe0] sm:$0xff]
  %v1705 = vld [vmem:[%s3 + $0xe8] sm:$0xff]
  %v1706 = vld [vmem:[%s3 + $0xf0] sm:$0xff]
  %v1707 = vld [vmem:[%s3 + $0xf8] sm:$0xff]
  %v1708 = vld [vmem:[%s3 + $0x100] sm:$0xff]
  %v1709 = vld [vmem:[%s3 + $0x108] sm:$0xff]
  %v1710 = vld [vmem:[%s3 + $0x110] sm:$0xff]
  %v1711 = vld [vmem:[%s3 + $0x118] sm:$0xff]
  %v1712 = vld [vmem:[%s3 + $0x120] sm:$0xff]
  %v1713 = vld [vmem:[%s3 + $0x128] sm:$0xff]
  %v1714 = vld [vmem:[%s3 + $0x130] sm:$0xff]
  %v1715 = vld [vmem:[%s3 + $0x138] sm:$0xff]
  %v1716 = vld [vmem:[%s3 + $0x140] sm:$0xff]
  %v1717 = vld [vmem:[%s3 + $0x148] sm:$0xff]
  %v1718 = vld [vmem:[%s3 + $0x150] sm:$0xff]
  %v1719 = vld [vmem:[%s3 + $0x158] sm:$0xff]
  %v1720 = vld [vmem:[%s3 + $0x160] sm:$0xff]
  %v1721 = vld [vmem:[%s3 + $0x168] sm:$0xff]
  %v1722 = vld [vmem:[%s3 + $0x170] sm:$0xff]
  %v1723 = vld [vmem:[%s3 + $0x178] sm:$0xff]
  %v1724 = vld [vmem:[%s3 + $0x180] sm:$0xff]
  %v1725 = vld [vmem:[%s3 + $0x188] sm:$0xff]
  %v1726 = vmul.f32 %v1185, %v1676
  %v1727 = vmul.f32 %v1195, %v1677
  %v1728 = vmul.f32 %v1205, %v1678
  %v1729 = vmul.f32 %v1215, %v1679
  %v1730 = vmul.f32 %v1225, %v1680
  %v1731 = vmul.f32 %v1235, %v1681
  %v1732 = vmul.f32 %v1245, %v1682
  %v1733 = vmul.f32 %v1255, %v1683
  %v1734 = vmul.f32 %v1265, %v1684
  %v1735 = vmul.f32 %v1275, %v1685
  %v1736 = vmul.f32 %v1285, %v1686
  %v1737 = vmul.f32 %v1295, %v1687
  %v1738 = vmul.f32 %v1305, %v1688
  %v1739 = vmul.f32 %v1315, %v1689
  %v1740 = vmul.f32 %v1325, %v1690
  %v1741 = vmul.f32 %v1335, %v1691
  %v1742 = vmul.f32 %v1345, %v1692
  %v1743 = vmul.f32 %v1355, %v1693
  %v1744 = vmul.f32 %v1365, %v1694
  %v1745 = vmul.f32 %v1375, %v1695
  %v1746 = vmul.f32 %v1385, %v1696
  %v1747 = vmul.f32 %v1395, %v1697
  %v1748 = vmul.f32 %v1405, %v1698
  %v1749 = vmul.f32 %v1415, %v1699
  %v1750 = vmul.f32 %v1425, %v1700
  %v1751 = vmul.f32 %v1435, %v1701
  %v1752 = vmul.f32 %v1445, %v1702
  %v1753 = vmul.f32 %v1455, %v1703
  %v1754 = vmul.f32 %v1465, %v1704
  %v1755 = vmul.f32 %v1475, %v1705
  %v1756 = vmul.f32 %v1485, %v1706
  %v1757 = vmul.f32 %v1495, %v1707
  %v1758 = vmul.f32 %v1505, %v1708
  %v1759 = vmul.f32 %v1515, %v1709
  %v1760 = vmul.f32 %v1525, %v1710
  %v1761 = vmul.f32 %v1535, %v1711
  %v1762 = vmul.f32 %v1545, %v1712
  %v1763 = vmul.f32 %v1555, %v1713
  %v1764 = vmul.f32 %v1565, %v1714
  %v1765 = vmul.f32 %v1575, %v1715
  %v1766 = vmul.f32 %v1585, %v1716
  %v1767 = vmul.f32 %v1595, %v1717
  %v1768 = vmul.f32 %v1605, %v1718
  %v1769 = vmul.f32 %v1615, %v1719
  %v1770 = vmul.f32 %v1625, %v1720
  %v1771 = vmul.f32 %v1635, %v1721
  %v1772 = vmul.f32 %v1645, %v1722
  %v1773 = vmul.f32 %v1655, %v1723
  %v1774 = vmul.f32 %v1665, %v1724
  %v1775 = vmul.f32 %v1675, %v1725
  %1777 = vset.pattern.permute.xlu0 0
  %1778 = vperm.xlu0 %1777, %v1726
  %v1779 = vpop.permute.xlu0 %1778
  %1782 = vset.pattern.permute.xlu0 0
  %1783 = vperm.xlu0 %1782, %v1727
  %v1784 = vpop.permute.xlu0 %1783
  %1787 = vset.pattern.permute.xlu0 0
  %1788 = vperm.xlu0 %1787, %v1728
  %v1789 = vpop.permute.xlu0 %1788
  %1792 = vset.pattern.permute.xlu0 0
  %1793 = vperm.xlu0 %1792, %v1729
  %v1794 = vpop.permute.xlu0 %1793
  %1797 = vset.pattern.permute.xlu0 0
  %1798 = vperm.xlu0 %1797, %v1730
  %v1799 = vpop.permute.xlu0 %1798
  %1802 = vset.pattern.permute.xlu0 0
  %1803 = vperm.xlu0 %1802, %v1731
  %v1804 = vpop.permute.xlu0 %1803
  %1807 = vset.pattern.permute.xlu0 0
  %1808 = vperm.xlu0 %1807, %v1732
  %v1809 = vpop.permute.xlu0 %1808
  %1812 = vset.pattern.permute.xlu0 0
  %1813 = vperm.xlu0 %1812, %v1733
  %v1814 = vpop.permute.xlu0 %1813
  %1817 = vset.pattern.permute.xlu0 0
  %1818 = vperm.xlu0 %1817, %v1734
  %v1819 = vpop.permute.xlu0 %1818
  %1822 = vset.pattern.permute.xlu0 0
  %1823 = vperm.xlu0 %1822, %v1735
  %v1824 = vpop.permute.xlu0 %1823
  %1827 = vset.pattern.permute.xlu0 0
  %1828 = vperm.xlu0 %1827, %v1736
  %v1829 = vpop.permute.xlu0 %1828
  %1832 = vset.pattern.permute.xlu0 0
  %1833 = vperm.xlu0 %1832, %v1737
  %v1834 = vpop.permute.xlu0 %1833
  %1837 = vset.pattern.permute.xlu0 0
  %1838 = vperm.xlu0 %1837, %v1738
  %v1839 = vpop.permute.xlu0 %1838
  %1842 = vset.pattern.permute.xlu0 0
  %1843 = vperm.xlu0 %1842, %v1739
  %v1844 = vpop.permute.xlu0 %1843
  %1847 = vset.pattern.permute.xlu0 0
  %1848 = vperm.xlu0 %1847, %v1740
  %v1849 = vpop.permute.xlu0 %1848
  %1852 = vset.pattern.permute.xlu0 0
  %1853 = vperm.xlu0 %1852, %v1741
  %v1854 = vpop.permute.xlu0 %1853
  %1857 = vset.pattern.permute.xlu0 0
  %1858 = vperm.xlu0 %1857, %v1742
  %v1859 = vpop.permute.xlu0 %1858
  %1862 = vset.pattern.permute.xlu0 0
  %1863 = vperm.xlu0 %1862, %v1743
  %v1864 = vpop.permute.xlu0 %1863
  %1867 = vset.pattern.permute.xlu0 0
  %1868 = vperm.xlu0 %1867, %v1744
  %v1869 = vpop.permute.xlu0 %1868
  %1872 = vset.pattern.permute.xlu0 0
  %1873 = vperm.xlu0 %1872, %v1745
  %v1874 = vpop.permute.xlu0 %1873
  %1877 = vset.pattern.permute.xlu0 0
  %1878 = vperm.xlu0 %1877, %v1746
  %v1879 = vpop.permute.xlu0 %1878
  %1882 = vset.pattern.permute.xlu0 0
  %1883 = vperm.xlu0 %1882, %v1747
  %v1884 = vpop.permute.xlu0 %1883
  %1887 = vset.pattern.permute.xlu0 0
  %1888 = vperm.xlu0 %1887, %v1748
  %v1889 = vpop.permute.xlu0 %1888
  %1892 = vset.pattern.permute.xlu0 0
  %1893 = vperm.xlu0 %1892, %v1749
  %v1894 = vpop.permute.xlu0 %1893
  %1897 = vset.pattern.permute.xlu0 0
  %1898 = vperm.xlu0 %1897, %v1750
  %v1899 = vpop.permute.xlu0 %1898
  %1902 = vset.pattern.permute.xlu0 0
  %1903 = vperm.xlu0 %1902, %v1751
  %v1904 = vpop.permute.xlu0 %1903
  %1907 = vset.pattern.permute.xlu0 0
  %1908 = vperm.xlu0 %1907, %v1752
  %v1909 = vpop.permute.xlu0 %1908
  %1912 = vset.pattern.permute.xlu0 0
  %1913 = vperm.xlu0 %1912, %v1753
  %v1914 = vpop.permute.xlu0 %1913
  %1917 = vset.pattern.permute.xlu0 0
  %1918 = vperm.xlu0 %1917, %v1754
  %v1919 = vpop.permute.xlu0 %1918
  %1922 = vset.pattern.permute.xlu0 0
  %1923 = vperm.xlu0 %1922, %v1755
  %v1924 = vpop.permute.xlu0 %1923
  %1927 = vset.pattern.permute.xlu0 0
  %1928 = vperm.xlu0 %1927, %v1756
  %v1929 = vpop.permute.xlu0 %1928
  %1932 = vset.pattern.permute.xlu0 0
  %1933 = vperm.xlu0 %1932, %v1757
  %v1934 = vpop.permute.xlu0 %1933
  %1937 = vset.pattern.permute.xlu0 0
  %1938 = vperm.xlu0 %1937, %v1758
  %v1939 = vpop.permute.xlu0 %1938
  %1942 = vset.pattern.permute.xlu0 0
  %1943 = vperm.xlu0 %1942, %v1759
  %v1944 = vpop.permute.xlu0 %1943
  %1947 = vset.pattern.permute.xlu0 0
  %1948 = vperm.xlu0 %1947, %v1760
  %v1949 = vpop.permute.xlu0 %1948
  %1952 = vset.pattern.permute.xlu0 0
  %1953 = vperm.xlu0 %1952, %v1761
  %v1954 = vpop.permute.xlu0 %1953
  %1957 = vset.pattern.permute.xlu0 0
  %1958 = vperm.xlu0 %1957, %v1762
  %v1959 = vpop.permute.xlu0 %1958
  %1962 = vset.pattern.permute.xlu0 0
  %1963 = vperm.xlu0 %1962, %v1763
  %v1964 = vpop.permute.xlu0 %1963
  %1967 = vset.pattern.permute.xlu0 0
  %1968 = vperm.xlu0 %1967, %v1764
  %v1969 = vpop.permute.xlu0 %1968
  %1972 = vset.pattern.permute.xlu0 0
  %1973 = vperm.xlu0 %1972, %v1765
  %v1974 = vpop.permute.xlu0 %1973
  %1977 = vset.pattern.permute.xlu0 0
  %1978 = vperm.xlu0 %1977, %v1766
  %v1979 = vpop.permute.xlu0 %1978
  %1982 = vset.pattern.permute.xlu0 0
  %1983 = vperm.xlu0 %1982, %v1767
  %v1984 = vpop.permute.xlu0 %1983
  %1987 = vset.pattern.permute.xlu0 0
  %1988 = vperm.xlu0 %1987, %v1768
  %v1989 = vpop.permute.xlu0 %1988
  %1992 = vset.pattern.permute.xlu0 0
  %1993 = vperm.xlu0 %1992, %v1769
  %v1994 = vpop.permute.xlu0 %1993
  %1997 = vset.pattern.permute.xlu0 0
  %1998 = vperm.xlu0 %1997, %v1770
  %v1999 = vpop.permute.xlu0 %1998
  %2002 = vset.pattern.permute.xlu0 0
  %2003 = vperm.xlu0 %2002, %v1771
  %v2004 = vpop.permute.xlu0 %2003
  %2007 = vset.pattern.permute.xlu0 0
  %2008 = vperm.xlu0 %2007, %v1772
  %v2009 = vpop.permute.xlu0 %2008
  %2012 = vset.pattern.permute.xlu0 0
  %2013 = vperm.xlu0 %2012, %v1773
  %v2014 = vpop.permute.xlu0 %2013
  %2017 = vset.pattern.permute.xlu0 0
  %2018 = vperm.xlu0 %2017, %v1774
  %v2019 = vpop.permute.xlu0 %2018
  %2022 = vset.pattern.permute.xlu0 0
  %2023 = vperm.xlu0 %2022, %v1775
  %v2024 = vpop.permute.xlu0 %2023
  %v2026 = vmul.f32 %v826, %v1779
  %v2027 = vmul.f32 %v827, %v1784
  %v2028 = vmul.f32 %v828, %v1789
  %v2029 = vmul.f32 %v829, %v1794
  %v2030 = vmul.f32 %v830, %v1799
  %v2031 = vmul.f32 %v831, %v1804
  %v2032 = vmul.f32 %v832, %v1809
  %v2033 = vmul.f32 %v833, %v1814
  %v2034 = vmul.f32 %v834, %v1819
  %v2035 = vmul.f32 %v835, %v1824
  %v2036 = vmul.f32 %v836, %v1829
  %v2037 = vmul.f32 %v837, %v1834
  %v2038 = vmul.f32 %v838, %v1839
  %v2039 = vmul.f32 %v839, %v1844
  %v2040 = vmul.f32 %v840, %v1849
  %v2041 = vmul.f32 %v841, %v1854
  %v2042 = vmul.f32 %v842, %v1859
  %v2043 = vmul.f32 %v843, %v1864
  %v2044 = vmul.f32 %v844, %v1869
  %v2045 = vmul.f32 %v845, %v1874
  %v2046 = vmul.f32 %v846, %v1879
  %v2047 = vmul.f32 %v847, %v1884
  %v2048 = vmul.f32 %v848, %v1889
  %v2049 = vmul.f32 %v849, %v1894
  %v2050 = vmul.f32 %v850, %v1899
  %v2051 = vmul.f32 %v851, %v1904
  %v2052 = vmul.f32 %v852, %v1909
  %v2053 = vmul.f32 %v853, %v1914
  %v2054 = vmul.f32 %v854, %v1919
  %v2055 = vmul.f32 %v855, %v1924
  %v2056 = vmul.f32 %v856, %v1929
  %v2057 = vmul.f32 %v857, %v1934
  %v2058 = vmul.f32 %v858, %v1939
  %v2059 = vmul.f32 %v859, %v1944
  %v2060 = vmul.f32 %v860, %v1949
  %v2061 = vmul.f32 %v861, %v1954
  %v2062 = vmul.f32 %v862, %v1959
  %v2063 = vmul.f32 %v863, %v1964
  %v2064 = vmul.f32 %v864, %v1969
  %v2065 = vmul.f32 %v865, %v1974
  %v2066 = vmul.f32 %v866, %v1979
  %v2067 = vmul.f32 %v867, %v1984
  %v2068 = vmul.f32 %v868, %v1989
  %v2069 = vmul.f32 %v869, %v1994
  %v2070 = vmul.f32 %v870, %v1999
  %v2071 = vmul.f32 %v871, %v2004
  %v2072 = vmul.f32 %v872, %v2009
  %v2073 = vmul.f32 %v873, %v2014
  %v2074 = vmul.f32 %v874, %v2019
  %v2075 = vmul.f32 %v875, %v2024
  %v2076 = vld [vmem:[%s4] sm:$0xff]
  %v2077 = vld [vmem:[%s4 + $0x8] sm:$0xff]
  %v2078 = vld [vmem:[%s4 + $0x10] sm:$0xff]
  %v2079 = vld [vmem:[%s4 + $0x18] sm:$0xff]
  %v2080 = vld [vmem:[%s4 + $0x20] sm:$0xff]
  %v2081 = vld [vmem:[%s4 + $0x28] sm:$0xff]
  %v2082 = vld [vmem:[%s4 + $0x30] sm:$0xff]
  %v2083 = vld [vmem:[%s4 + $0x38] sm:$0xff]
  %v2084 = vld [vmem:[%s4 + $0x40] sm:$0xff]
  %v2085 = vld [vmem:[%s4 + $0x48] sm:$0xff]
  %v2086 = vld [vmem:[%s4 + $0x50] sm:$0xff]
  %v2087 = vld [vmem:[%s4 + $0x58] sm:$0xff]
  %v2088 = vld [vmem:[%s4 + $0x60] sm:$0xff]
  %v2089 = vld [vmem:[%s4 + $0x68] sm:$0xff]
  %v2090 = vld [vmem:[%s4 + $0x70] sm:$0xff]
  %v2091 = vld [vmem:[%s4 + $0x78] sm:$0xff]
  %v2092 = vld [vmem:[%s4 + $0x80] sm:$0xff]
  %v2093 = vld [vmem:[%s4 + $0x88] sm:$0xff]
  %v2094 = vld [vmem:[%s4 + $0x90] sm:$0xff]
  %v2095 = vld [vmem:[%s4 + $0x98] sm:$0xff]
  %v2096 = vld [vmem:[%s4 + $0xa0] sm:$0xff]
  %v2097 = vld [vmem:[%s4 + $0xa8] sm:$0xff]
  %v2098 = vld [vmem:[%s4 + $0xb0] sm:$0xff]
  %v2099 = vld [vmem:[%s4 + $0xb8] sm:$0xff]
  %v2100 = vld [vmem:[%s4 + $0xc0] sm:$0xff]
  %v2101 = vld [vmem:[%s4 + $0xc8] sm:$0xff]
  %v2102 = vld [vmem:[%s4 + $0xd0] sm:$0xff]
  %v2103 = vld [vmem:[%s4 + $0xd8] sm:$0xff]
  %v2104 = vld [vmem:[%s4 + $0xe0] sm:$0xff]
  %v2105 = vld [vmem:[%s4 + $0xe8] sm:$0xff]
  %v2106 = vld [vmem:[%s4 + $0xf0] sm:$0xff]
  %v2107 = vld [vmem:[%s4 + $0xf8] sm:$0xff]
  %v2108 = vld [vmem:[%s4 + $0x100] sm:$0xff]
  %v2109 = vld [vmem:[%s4 + $0x108] sm:$0xff]
  %v2110 = vld [vmem:[%s4 + $0x110] sm:$0xff]
  %v2111 = vld [vmem:[%s4 + $0x118] sm:$0xff]
  %v2112 = vld [vmem:[%s4 + $0x120] sm:$0xff]
  %v2113 = vld [vmem:[%s4 + $0x128] sm:$0xff]
  %v2114 = vld [vmem:[%s4 + $0x130] sm:$0xff]
  %v2115 = vld [vmem:[%s4 + $0x138] sm:$0xff]
  %v2116 = vld [vmem:[%s4 + $0x140] sm:$0xff]
  %v2117 = vld [vmem:[%s4 + $0x148] sm:$0xff]
  %v2118 = vld [vmem:[%s4 + $0x150] sm:$0xff]
  %v2119 = vld [vmem:[%s4 + $0x158] sm:$0xff]
  %v2120 = vld [vmem:[%s4 + $0x160] sm:$0xff]
  %v2121 = vld [vmem:[%s4 + $0x168] sm:$0xff]
  %v2122 = vld [vmem:[%s4 + $0x170] sm:$0xff]
  %v2123 = vld [vmem:[%s4 + $0x178] sm:$0xff]
  %v2124 = vld [vmem:[%s4 + $0x180] sm:$0xff]
  %v2125 = vld [vmem:[%s4 + $0x188] sm:$0xff]
  %2127 = vset.pattern.permute.xlu0 0
  %2128 = vperm.xlu0 %2127, %v2076
  %v2129 = vpop.permute.xlu0 %2128
  %2132 = vset.pattern.permute.xlu0 0
  %2133 = vperm.xlu0 %2132, %v2077
  %v2134 = vpop.permute.xlu0 %2133
  %2137 = vset.pattern.permute.xlu0 0
  %2138 = vperm.xlu0 %2137, %v2078
  %v2139 = vpop.permute.xlu0 %2138
  %2142 = vset.pattern.permute.xlu0 0
  %2143 = vperm.xlu0 %2142, %v2079
  %v2144 = vpop.permute.xlu0 %2143
  %2147 = vset.pattern.permute.xlu0 0
  %2148 = vperm.xlu0 %2147, %v2080
  %v2149 = vpop.permute.xlu0 %2148
  %2152 = vset.pattern.permute.xlu0 0
  %2153 = vperm.xlu0 %2152, %v2081
  %v2154 = vpop.permute.xlu0 %2153
  %2157 = vset.pattern.permute.xlu0 0
  %2158 = vperm.xlu0 %2157, %v2082
  %v2159 = vpop.permute.xlu0 %2158
  %2162 = vset.pattern.permute.xlu0 0
  %2163 = vperm.xlu0 %2162, %v2083
  %v2164 = vpop.permute.xlu0 %2163
  %2167 = vset.pattern.permute.xlu0 0
  %2168 = vperm.xlu0 %2167, %v2084
  %v2169 = vpop.permute.xlu0 %2168
  %2172 = vset.pattern.permute.xlu0 0
  %2173 = vperm.xlu0 %2172, %v2085
  %v2174 = vpop.permute.xlu0 %2173
  %2177 = vset.pattern.permute.xlu0 0
  %2178 = vperm.xlu0 %2177, %v2086
  %v2179 = vpop.permute.xlu0 %2178
  %2182 = vset.pattern.permute.xlu0 0
  %2183 = vperm.xlu0 %2182, %v2087
  %v2184 = vpop.permute.xlu0 %2183
  %2187 = vset.pattern.permute.xlu0 0
  %2188 = vperm.xlu0 %2187, %v2088
  %v2189 = vpop.permute.xlu0 %2188
  %2192 = vset.pattern.permute.xlu0 0
  %2193 = vperm.xlu0 %2192, %v2089
  %v2194 = vpop.permute.xlu0 %2193
  %2197 = vset.pattern.permute.xlu0 0
  %2198 = vperm.xlu0 %2197, %v2090
  %v2199 = vpop.permute.xlu0 %2198
  %2202 = vset.pattern.permute.xlu0 0
  %2203 = vperm.xlu0 %2202, %v2091
  %v2204 = vpop.permute.xlu0 %2203
  %2207 = vset.pattern.permute.xlu0 0
  %2208 = vperm.xlu0 %2207, %v2092
  %v2209 = vpop.permute.xlu0 %2208
  %2212 = vset.pattern.permute.xlu0 0
  %2213 = vperm.xlu0 %2212, %v2093
  %v2214 = vpop.permute.xlu0 %2213
  %2217 = vset.pattern.permute.xlu0 0
  %2218 = vperm.xlu0 %2217, %v2094
  %v2219 = vpop.permute.xlu0 %2218
  %2222 = vset.pattern.permute.xlu0 0
  %2223 = vperm.xlu0 %2222, %v2095
  %v2224 = vpop.permute.xlu0 %2223
  %2227 = vset.pattern.permute.xlu0 0
  %2228 = vperm.xlu0 %2227, %v2096
  %v2229 = vpop.permute.xlu0 %2228
  %2232 = vset.pattern.permute.xlu0 0
  %2233 = vperm.xlu0 %2232, %v2097
  %v2234 = vpop.permute.xlu0 %2233
  %2237 = vset.pattern.permute.xlu0 0
  %2238 = vperm.xlu0 %2237, %v2098
  %v2239 = vpop.permute.xlu0 %2238
  %2242 = vset.pattern.permute.xlu0 0
  %2243 = vperm.xlu0 %2242, %v2099
  %v2244 = vpop.permute.xlu0 %2243
  %2247 = vset.pattern.permute.xlu0 0
  %2248 = vperm.xlu0 %2247, %v2100
  %v2249 = vpop.permute.xlu0 %2248
  %2252 = vset.pattern.permute.xlu0 0
  %2253 = vperm.xlu0 %2252, %v2101
  %v2254 = vpop.permute.xlu0 %2253
  %2257 = vset.pattern.permute.xlu0 0
  %2258 = vperm.xlu0 %2257, %v2102
  %v2259 = vpop.permute.xlu0 %2258
  %2262 = vset.pattern.permute.xlu0 0
  %2263 = vperm.xlu0 %2262, %v2103
  %v2264 = vpop.permute.xlu0 %2263
  %2267 = vset.pattern.permute.xlu0 0
  %2268 = vperm.xlu0 %2267, %v2104
  %v2269 = vpop.permute.xlu0 %2268
  %2272 = vset.pattern.permute.xlu0 0
  %2273 = vperm.xlu0 %2272, %v2105
  %v2274 = vpop.permute.xlu0 %2273
  %2277 = vset.pattern.permute.xlu0 0
  %2278 = vperm.xlu0 %2277, %v2106
  %v2279 = vpop.permute.xlu0 %2278
  %2282 = vset.pattern.permute.xlu0 0
  %2283 = vperm.xlu0 %2282, %v2107
  %v2284 = vpop.permute.xlu0 %2283
  %2287 = vset.pattern.permute.xlu0 0
  %2288 = vperm.xlu0 %2287, %v2108
  %v2289 = vpop.permute.xlu0 %2288
  %2292 = vset.pattern.permute.xlu0 0
  %2293 = vperm.xlu0 %2292, %v2109
  %v2294 = vpop.permute.xlu0 %2293
  %2297 = vset.pattern.permute.xlu0 0
  %2298 = vperm.xlu0 %2297, %v2110
  %v2299 = vpop.permute.xlu0 %2298
  %2302 = vset.pattern.permute.xlu0 0
  %2303 = vperm.xlu0 %2302, %v2111
  %v2304 = vpop.permute.xlu0 %2303
  %2307 = vset.pattern.permute.xlu0 0
  %2308 = vperm.xlu0 %2307, %v2112
  %v2309 = vpop.permute.xlu0 %2308
  %2312 = vset.pattern.permute.xlu0 0
  %2313 = vperm.xlu0 %2312, %v2113
  %v2314 = vpop.permute.xlu0 %2313
  %2317 = vset.pattern.permute.xlu0 0
  %2318 = vperm.xlu0 %2317, %v2114
  %v2319 = vpop.permute.xlu0 %2318
  %2322 = vset.pattern.permute.xlu0 0
  %2323 = vperm.xlu0 %2322, %v2115
  %v2324 = vpop.permute.xlu0 %2323
  %2327 = vset.pattern.permute.xlu0 0
  %2328 = vperm.xlu0 %2327, %v2116
  %v2329 = vpop.permute.xlu0 %2328
  %2332 = vset.pattern.permute.xlu0 0
  %2333 = vperm.xlu0 %2332, %v2117
  %v2334 = vpop.permute.xlu0 %2333
  %2337 = vset.pattern.permute.xlu0 0
  %2338 = vperm.xlu0 %2337, %v2118
  %v2339 = vpop.permute.xlu0 %2338
  %2342 = vset.pattern.permute.xlu0 0
  %2343 = vperm.xlu0 %2342, %v2119
  %v2344 = vpop.permute.xlu0 %2343
  %2347 = vset.pattern.permute.xlu0 0
  %2348 = vperm.xlu0 %2347, %v2120
  %v2349 = vpop.permute.xlu0 %2348
  %2352 = vset.pattern.permute.xlu0 0
  %2353 = vperm.xlu0 %2352, %v2121
  %v2354 = vpop.permute.xlu0 %2353
  %2357 = vset.pattern.permute.xlu0 0
  %2358 = vperm.xlu0 %2357, %v2122
  %v2359 = vpop.permute.xlu0 %2358
  %2362 = vset.pattern.permute.xlu0 0
  %2363 = vperm.xlu0 %2362, %v2123
  %v2364 = vpop.permute.xlu0 %2363
  %2367 = vset.pattern.permute.xlu0 0
  %2368 = vperm.xlu0 %2367, %v2124
  %v2369 = vpop.permute.xlu0 %2368
  %2372 = vset.pattern.permute.xlu0 0
  %2373 = vperm.xlu0 %2372, %v2125
  %v2374 = vpop.permute.xlu0 %2373
  %v2376 = vadd.f32 %v2026, %v2129
  %v2377 = vadd.f32 %v2027, %v2134
  %v2378 = vadd.f32 %v2028, %v2139
  %v2379 = vadd.f32 %v2029, %v2144
  %v2380 = vadd.f32 %v2030, %v2149
  %v2381 = vadd.f32 %v2031, %v2154
  %v2382 = vadd.f32 %v2032, %v2159
  %v2383 = vadd.f32 %v2033, %v2164
  %v2384 = vadd.f32 %v2034, %v2169
  %v2385 = vadd.f32 %v2035, %v2174
  %v2386 = vadd.f32 %v2036, %v2179
  %v2387 = vadd.f32 %v2037, %v2184
  %v2388 = vadd.f32 %v2038, %v2189
  %v2389 = vadd.f32 %v2039, %v2194
  %v2390 = vadd.f32 %v2040, %v2199
  %v2391 = vadd.f32 %v2041, %v2204
  %v2392 = vadd.f32 %v2042, %v2209
  %v2393 = vadd.f32 %v2043, %v2214
  %v2394 = vadd.f32 %v2044, %v2219
  %v2395 = vadd.f32 %v2045, %v2224
  %v2396 = vadd.f32 %v2046, %v2229
  %v2397 = vadd.f32 %v2047, %v2234
  %v2398 = vadd.f32 %v2048, %v2239
  %v2399 = vadd.f32 %v2049, %v2244
  %v2400 = vadd.f32 %v2050, %v2249
  %v2401 = vadd.f32 %v2051, %v2254
  %v2402 = vadd.f32 %v2052, %v2259
  %v2403 = vadd.f32 %v2053, %v2264
  %v2404 = vadd.f32 %v2054, %v2269
  %v2405 = vadd.f32 %v2055, %v2274
  %v2406 = vadd.f32 %v2056, %v2279
  %v2407 = vadd.f32 %v2057, %v2284
  %v2408 = vadd.f32 %v2058, %v2289
  %v2409 = vadd.f32 %v2059, %v2294
  %v2410 = vadd.f32 %v2060, %v2299
  %v2411 = vadd.f32 %v2061, %v2304
  %v2412 = vadd.f32 %v2062, %v2309
  %v2413 = vadd.f32 %v2063, %v2314
  %v2414 = vadd.f32 %v2064, %v2319
  %v2415 = vadd.f32 %v2065, %v2324
  %v2416 = vadd.f32 %v2066, %v2329
  %v2417 = vadd.f32 %v2067, %v2334
  %v2418 = vadd.f32 %v2068, %v2339
  %v2419 = vadd.f32 %v2069, %v2344
  %v2420 = vadd.f32 %v2070, %v2349
  %v2421 = vadd.f32 %v2071, %v2354
  %v2422 = vadd.f32 %v2072, %v2359
  %v2423 = vadd.f32 %v2073, %v2364
  %v2424 = vadd.f32 %v2074, %v2369
  %v2425 = vadd.f32 %v2075, %v2374
  %v2426 = vld [vmem:[%s2] sm:$0xff]
  %v2427 = vld [vmem:[%s2 + $0x8] sm:$0xff]
  %v2428 = vld [vmem:[%s2 + $0x10] sm:$0xff]
  %v2429 = vld [vmem:[%s2 + $0x18] sm:$0xff]
  %v2430 = vld [vmem:[%s2 + $0x20] sm:$0xff]
  %v2431 = vld [vmem:[%s2 + $0x28] sm:$0xff]
  %v2432 = vld [vmem:[%s2 + $0x30] sm:$0xff]
  %v2433 = vld [vmem:[%s2 + $0x38] sm:$0xff]
  %v2434 = vld [vmem:[%s2 + $0x40] sm:$0xff]
  %v2435 = vld [vmem:[%s2 + $0x48] sm:$0xff]
  %v2436 = vld [vmem:[%s2 + $0x50] sm:$0xff]
  %v2437 = vld [vmem:[%s2 + $0x58] sm:$0xff]
  %v2438 = vld [vmem:[%s2 + $0x60] sm:$0xff]
  %v2439 = vld [vmem:[%s2 + $0x68] sm:$0xff]
  %v2440 = vld [vmem:[%s2 + $0x70] sm:$0xff]
  %v2441 = vld [vmem:[%s2 + $0x78] sm:$0xff]
  %v2442 = vld [vmem:[%s2 + $0x80] sm:$0xff]
  %v2443 = vld [vmem:[%s2 + $0x88] sm:$0xff]
  %v2444 = vld [vmem:[%s2 + $0x90] sm:$0xff]
  %v2445 = vld [vmem:[%s2 + $0x98] sm:$0xff]
  %v2446 = vld [vmem:[%s2 + $0xa0] sm:$0xff]
  %v2447 = vld [vmem:[%s2 + $0xa8] sm:$0xff]
  %v2448 = vld [vmem:[%s2 + $0xb0] sm:$0xff]
  %v2449 = vld [vmem:[%s2 + $0xb8] sm:$0xff]
  %v2450 = vld [vmem:[%s2 + $0xc0] sm:$0xff]
  %v2451 = vld [vmem:[%s2 + $0xc8] sm:$0xff]
  %v2452 = vld [vmem:[%s2 + $0xd0] sm:$0xff]
  %v2453 = vld [vmem:[%s2 + $0xd8] sm:$0xff]
  %v2454 = vld [vmem:[%s2 + $0xe0] sm:$0xff]
  %v2455 = vld [vmem:[%s2 + $0xe8] sm:$0xff]
  %v2456 = vld [vmem:[%s2 + $0xf0] sm:$0xff]
  %v2457 = vld [vmem:[%s2 + $0xf8] sm:$0xff]
  %v2458 = vld [vmem:[%s2 + $0x100] sm:$0xff]
  %v2459 = vld [vmem:[%s2 + $0x108] sm:$0xff]
  %v2460 = vld [vmem:[%s2 + $0x110] sm:$0xff]
  %v2461 = vld [vmem:[%s2 + $0x118] sm:$0xff]
  %v2462 = vld [vmem:[%s2 + $0x120] sm:$0xff]
  %v2463 = vld [vmem:[%s2 + $0x128] sm:$0xff]
  %v2464 = vld [vmem:[%s2 + $0x130] sm:$0xff]
  %v2465 = vld [vmem:[%s2 + $0x138] sm:$0xff]
  %v2466 = vld [vmem:[%s2 + $0x140] sm:$0xff]
  %v2467 = vld [vmem:[%s2 + $0x148] sm:$0xff]
  %v2468 = vld [vmem:[%s2 + $0x150] sm:$0xff]
  %v2469 = vld [vmem:[%s2 + $0x158] sm:$0xff]
  %v2470 = vld [vmem:[%s2 + $0x160] sm:$0xff]
  %v2471 = vld [vmem:[%s2 + $0x168] sm:$0xff]
  %v2472 = vld [vmem:[%s2 + $0x170] sm:$0xff]
  %v2473 = vld [vmem:[%s2 + $0x178] sm:$0xff]
  %v2474 = vld [vmem:[%s2 + $0x180] sm:$0xff]
  %v2475 = vld [vmem:[%s2 + $0x188] sm:$0xff]
  %v2476 = vadd.f32 %v2376, %v2426
  %v2477 = vadd.f32 %v2377, %v2427
  %v2478 = vadd.f32 %v2378, %v2428
  %v2479 = vadd.f32 %v2379, %v2429
  %v2480 = vadd.f32 %v2380, %v2430
  %v2481 = vadd.f32 %v2381, %v2431
  %v2482 = vadd.f32 %v2382, %v2432
  %v2483 = vadd.f32 %v2383, %v2433
  %v2484 = vadd.f32 %v2384, %v2434
  %v2485 = vadd.f32 %v2385, %v2435
  %v2486 = vadd.f32 %v2386, %v2436
  %v2487 = vadd.f32 %v2387, %v2437
  %v2488 = vadd.f32 %v2388, %v2438
  %v2489 = vadd.f32 %v2389, %v2439
  %v2490 = vadd.f32 %v2390, %v2440
  %v2491 = vadd.f32 %v2391, %v2441
  %v2492 = vadd.f32 %v2392, %v2442
  %v2493 = vadd.f32 %v2393, %v2443
  %v2494 = vadd.f32 %v2394, %v2444
  %v2495 = vadd.f32 %v2395, %v2445
  %v2496 = vadd.f32 %v2396, %v2446
  %v2497 = vadd.f32 %v2397, %v2447
  %v2498 = vadd.f32 %v2398, %v2448
  %v2499 = vadd.f32 %v2399, %v2449
  %v2500 = vadd.f32 %v2400, %v2450
  %v2501 = vadd.f32 %v2401, %v2451
  %v2502 = vadd.f32 %v2402, %v2452
  %v2503 = vadd.f32 %v2403, %v2453
  %v2504 = vadd.f32 %v2404, %v2454
  %v2505 = vadd.f32 %v2405, %v2455
  %v2506 = vadd.f32 %v2406, %v2456
  %v2507 = vadd.f32 %v2407, %v2457
  %v2508 = vadd.f32 %v2408, %v2458
  %v2509 = vadd.f32 %v2409, %v2459
  %v2510 = vadd.f32 %v2410, %v2460
  %v2511 = vadd.f32 %v2411, %v2461
  %v2512 = vadd.f32 %v2412, %v2462
  %v2513 = vadd.f32 %v2413, %v2463
  %v2514 = vadd.f32 %v2414, %v2464
  %v2515 = vadd.f32 %v2415, %v2465
  %v2516 = vadd.f32 %v2416, %v2466
  %v2517 = vadd.f32 %v2417, %v2467
  %v2518 = vadd.f32 %v2418, %v2468
  %v2519 = vadd.f32 %v2419, %v2469
  %v2520 = vadd.f32 %v2420, %v2470
  %v2521 = vadd.f32 %v2421, %v2471
  %v2522 = vadd.f32 %v2422, %v2472
  %v2523 = vadd.f32 %v2423, %v2473
  %v2524 = vadd.f32 %v2424, %v2474
  %v2525 = vadd.f32 %v2425, %v2475
  %v2526 = vmax.f32 %v2476, 0.0
  %v2527 = vmax.f32 %v2477, 0.0
  %v2528 = vmax.f32 %v2478, 0.0
  %v2529 = vmax.f32 %v2479, 0.0
  %v2530 = vmax.f32 %v2480, 0.0
  %v2531 = vmax.f32 %v2481, 0.0
  %v2532 = vmax.f32 %v2482, 0.0
  %v2533 = vmax.f32 %v2483, 0.0
  %v2534 = vmax.f32 %v2484, 0.0
  %v2535 = vmax.f32 %v2485, 0.0
  %v2536 = vmax.f32 %v2486, 0.0
  %v2537 = vmax.f32 %v2487, 0.0
  %v2538 = vmax.f32 %v2488, 0.0
  %v2539 = vmax.f32 %v2489, 0.0
  %v2540 = vmax.f32 %v2490, 0.0
  %v2541 = vmax.f32 %v2491, 0.0
  %v2542 = vmax.f32 %v2492, 0.0
  %v2543 = vmax.f32 %v2493, 0.0
  %v2544 = vmax.f32 %v2494, 0.0
  %v2545 = vmax.f32 %v2495, 0.0
  %v2546 = vmax.f32 %v2496, 0.0
  %v2547 = vmax.f32 %v2497, 0.0
  %v2548 = vmax.f32 %v2498, 0.0
  %v2549 = vmax.f32 %v2499, 0.0
  %v2550 = vmax.f32 %v2500, 0.0
  %v2551 = vmax.f32 %v2501, 0.0
  %v2552 = vmax.f32 %v2502, 0.0
  %v2553 = vmax.f32 %v2503, 0.0
  %v2554 = vmax.f32 %v2504, 0.0
  %v2555 = vmax.f32 %v2505, 0.0
  %v2556 = vmax.f32 %v2506, 0.0
  %v2557 = vmax.f32 %v2507, 0.0
  %v2558 = vmax.f32 %v2508, 0.0
  %v2559 = vmax.f32 %v2509, 0.0
  %v2560 = vmax.f32 %v2510, 0.0
  %v2561 = vmax.f32 %v2511, 0.0
  %v2562 = vmax.f32 %v2512, 0.0
  %v2563 = vmax.f32 %v2513, 0.0
  %v2564 = vmax.f32 %v2514, 0.0
  %v2565 = vmax.f32 %v2515, 0.0
  %v2566 = vmax.f32 %v2516, 0.0
  %v2567 = vmax.f32 %v2517, 0.0
  %v2568 = vmax.f32 %v2518, 0.0
  %v2569 = vmax.f32 %v2519, 0.0
  %v2570 = vmax.f32 %v2520, 0.0
  %v2571 = vmax.f32 %v2521, 0.0
  %v2572 = vmax.f32 %v2522, 0.0
  %v2573 = vmax.f32 %v2523, 0.0
  %v2574 = vmax.f32 %v2524, 0.0
  %v2575 = vmax.f32 %v2525, 0.0
  %2576 = vst.msk [vmem:[%s5] sm:$0xff] %vm625, %v2526
  %2577 = vst.msk [vmem:[%s5 + $0x8] sm:$0xff] %vm625, %v2527
  %2578 = vst.msk [vmem:[%s5 + $0x10] sm:$0xff] %vm625, %v2528
  %2579 = vst.msk [vmem:[%s5 + $0x18] sm:$0xff] %vm625, %v2529
  %2580 = vst.msk [vmem:[%s5 + $0x20] sm:$0xff] %vm625, %v2530
  %2581 = vst.msk [vmem:[%s5 + $0x28] sm:$0xff] %vm625, %v2531
  %2582 = vst.msk [vmem:[%s5 + $0x30] sm:$0xff] %vm625, %v2532
  %2583 = vst.msk [vmem:[%s5 + $0x38] sm:$0xff] %vm625, %v2533
  %2584 = vst.msk [vmem:[%s5 + $0x40] sm:$0xff] %vm625, %v2534
  %2585 = vst.msk [vmem:[%s5 + $0x48] sm:$0xff] %vm625, %v2535
  %2586 = vst.msk [vmem:[%s5 + $0x50] sm:$0xff] %vm625, %v2536
  %2587 = vst.msk [vmem:[%s5 + $0x58] sm:$0xff] %vm625, %v2537
  %2588 = vst.msk [vmem:[%s5 + $0x60] sm:$0xff] %vm625, %v2538
  %2589 = vst.msk [vmem:[%s5 + $0x68] sm:$0xff] %vm625, %v2539
  %2590 = vst.msk [vmem:[%s5 + $0x70] sm:$0xff] %vm625, %v2540
  %2591 = vst.msk [vmem:[%s5 + $0x78] sm:$0xff] %vm625, %v2541
  %2592 = vst.msk [vmem:[%s5 + $0x80] sm:$0xff] %vm625, %v2542
  %2593 = vst.msk [vmem:[%s5 + $0x88] sm:$0xff] %vm625, %v2543
  %2594 = vst.msk [vmem:[%s5 + $0x90] sm:$0xff] %vm625, %v2544
  %2595 = vst.msk [vmem:[%s5 + $0x98] sm:$0xff] %vm625, %v2545
  %2596 = vst.msk [vmem:[%s5 + $0xa0] sm:$0xff] %vm625, %v2546
  %2597 = vst.msk [vmem:[%s5 + $0xa8] sm:$0xff] %vm625, %v2547
  %2598 = vst.msk [vmem:[%s5 + $0xb0] sm:$0xff] %vm625, %v2548
  %2599 = vst.msk [vmem:[%s5 + $0xb8] sm:$0xff] %vm625, %v2549
  %2600 = vst.msk [vmem:[%s5 + $0xc0] sm:$0xff] %vm625, %v2550
  %2601 = vst.msk [vmem:[%s5 + $0xc8] sm:$0xff] %vm625, %v2551
  %2602 = vst.msk [vmem:[%s5 + $0xd0] sm:$0xff] %vm625, %v2552
  %2603 = vst.msk [vmem:[%s5 + $0xd8] sm:$0xff] %vm625, %v2553
  %2604 = vst.msk [vmem:[%s5 + $0xe0] sm:$0xff] %vm625, %v2554
  %2605 = vst.msk [vmem:[%s5 + $0xe8] sm:$0xff] %vm625, %v2555
  %2606 = vst.msk [vmem:[%s5 + $0xf0] sm:$0xff] %vm625, %v2556
  %2607 = vst.msk [vmem:[%s5 + $0xf8] sm:$0xff] %vm625, %v2557
  %2608 = vst.msk [vmem:[%s5 + $0x100] sm:$0xff] %vm625, %v2558
  %2609 = vst.msk [vmem:[%s5 + $0x108] sm:$0xff] %vm625, %v2559
  %2610 = vst.msk [vmem:[%s5 + $0x110] sm:$0xff] %vm625, %v2560
  %2611 = vst.msk [vmem:[%s5 + $0x118] sm:$0xff] %vm625, %v2561
  %2612 = vst.msk [vmem:[%s5 + $0x120] sm:$0xff] %vm625, %v2562
  %2613 = vst.msk [vmem:[%s5 + $0x128] sm:$0xff] %vm625, %v2563
  %2614 = vst.msk [vmem:[%s5 + $0x130] sm:$0xff] %vm625, %v2564
  %2615 = vst.msk [vmem:[%s5 + $0x138] sm:$0xff] %vm625, %v2565
  %2616 = vst.msk [vmem:[%s5 + $0x140] sm:$0xff] %vm625, %v2566
  %2617 = vst.msk [vmem:[%s5 + $0x148] sm:$0xff] %vm625, %v2567
  %2618 = vst.msk [vmem:[%s5 + $0x150] sm:$0xff] %vm625, %v2568
  %2619 = vst.msk [vmem:[%s5 + $0x158] sm:$0xff] %vm625, %v2569
  %2620 = vst.msk [vmem:[%s5 + $0x160] sm:$0xff] %vm625, %v2570
  %2621 = vst.msk [vmem:[%s5 + $0x168] sm:$0xff] %vm625, %v2571
  %2622 = vst.msk [vmem:[%s5 + $0x170] sm:$0xff] %vm625, %v2572
  %2623 = vst.msk [vmem:[%s5 + $0x178] sm:$0xff] %vm625, %v2573
  %2624 = vst.msk [vmem:[%s5 + $0x180] sm:$0xff] %vm625, %v2574
  %2625 = vst.msk [vmem:[%s5 + $0x188] sm:$0xff] %vm625, %v2575
  // Predicated region
  $region22: #{conv_bn_add_relu.1} parent=0 // pred_check
    _
  $region23: #{conv_bn_add_relu.1} parent=0 // pred_check_branch
    %2627 = sbr.rel (0) target = $region25
  $region24: #{conv_bn_add_relu.1} parent=0 // pred_region
    _
  $region25: #{conv_bn_add_relu.1} parent=0 // pred_fallthru
    _
  // Predicated region
  $region26: #{conv_bn_add_relu.1} parent=0 // pred_check
    _
  $region27: #{conv_bn_add_relu.1} parent=0 // pred_check_branch
    %2629 = sbr.rel (0) target = $region29
  $region28: #{conv_bn_add_relu.1} parent=0 // pred_region
    _
  $region29: #{conv_bn_add_relu.1} parent=0 // pred_fallthru
    _

</llo_original>
